<compile_context>
chip_gen: v6e
topology: v6e:2x2x1
jax: 0.10.0
libtpu: 0.0.40
codegen_flags: <defaults>
</compile_context>

<pallas_src>
import functools

import jax
import jax.numpy as jnp
from jax.experimental import pallas as pl
from jax.experimental.pallas import tpu as pltpu


# ----------------------------------------------------------------------------
# Fused kernel: streaming patch-sum + stem + folded attention + classifier
# ----------------------------------------------------------------------------
def _fused_kernel(patch_ref, wstem_ref, bstem_ref,
                  wvo_ref, bvo_ref,
                  w1_ref, b1_ref, gamma_ref, beta_ref,
                  w2_ref, b2_ref,
                  o_ref, acc_ref, *, inv_num_patches, lane_blocks):
    """Grid = (batch_chunks, patch_chunks); patch axis (last) is the reduction.

    patch_ref : [TB, K, PC]   bf16 patches, patch index on lanes (lane-dense)
    wstem_ref : [K, 768]      bf16 patch-embed weight (swin backbone surrogate)
    wvo_ref   : [768, 512]    bf16 folded swin_proj @ W_v @ W_out
    w1_ref    : [512, 256]    bf16 classifier Linear 1
    w2_ref    : [256, NCP]    bf16 classifier Linear 2 (classes padded to 128)
    o_ref     : [TB, 1, NCP]  f32 output logits (padded)
    acc_ref   : [TB, K, 128]  f32 scratch: lane-blocked patch-sum accumulator
    """
    pc = pl.program_id(1)

    @pl.when(pc == 0)
    def _init():
        acc_ref[...] = jnp.zeros_like(acc_ref)

    # ---- streaming patch sum (GAP commutes with the linear patch embed) ----
    # Pure VPU adds over 128-lane blocks; no matmul, no cross-lane reduce, no
    # reshape in the hot loop.  The kernel is HBM-bandwidth bound here.
    chunk = patch_ref[...]                                   # (TB, K, PC) bf16
    s = chunk[:, :, 0:128].astype(jnp.float32)
    for i in range(1, lane_blocks):                          # static, unrolled
        s = s + chunk[:, :, i * 128:(i + 1) * 128].astype(jnp.float32)
    acc_ref[...] += s                                        # (TB, K, 128) f32

    # ---- last patch chunk: stem matmul + folded attention + classifier -----
    @pl.when(pc == pl.num_programs(1) - 1)
    def _head():
        psum = jnp.sum(acc_ref[...], axis=-1)                # (TB, K) f32
        mean_patch = psum * inv_num_patches                  # GAP over patches

        # backbone stem folded through GAP: mean(patch) @ Wstem + bstem
        feat = jnp.dot(mean_patch.astype(jnp.bfloat16), wstem_ref[...],
                       preferred_element_type=jnp.float32) + bstem_ref[...]

        # cross-attention with seq_len == 1 folded to a single linear layer
        h = jnp.dot(feat.astype(jnp.bfloat16), wvo_ref[...],
                    preferred_element_type=jnp.float32) + bvo_ref[...]

        # classifier: Linear(512,256) -> LayerNorm(256) -> ReLU -> Linear(256,nc)
        h = jnp.dot(h.astype(jnp.bfloat16), w1_ref[...],
                    preferred_element_type=jnp.float32) + b1_ref[...]
        mu = jnp.mean(h, axis=-1, keepdims=True)
        var = jnp.mean((h - mu) * (h - mu), axis=-1, keepdims=True)
        h = (h - mu) * jax.lax.rsqrt(var + 1e-5)
        h = h * gamma_ref[...] + beta_ref[...]
        h = jnp.maximum(h, 0.0)
        logits = jnp.dot(h.astype(jnp.bfloat16), w2_ref[...],
                         preferred_element_type=jnp.float32) + b2_ref[...]
        o_ref[...] = logits[:, None, :]                      # (TB, 1, NCP)


# ----------------------------------------------------------------------------
# Host-side glue
# ----------------------------------------------------------------------------
def _full_spec(shape):
    nd = len(shape)
    return pl.BlockSpec(shape, lambda i, j: (0,) * nd)


def _choose_tiles(B, K, P):
    # Batch tile: largest divisor of B that still leaves >= 2 batch chunks so
    # the "parallel" axis can shard across v7x's two TensorCores; capped at 32
    # rows to bound VMEM.  (B == 1 degenerates to a single chunk.)
    if B == 1:
        tb = 1
    else:
        cap = min(32, B // 2)
        tb = max(d for d in range(1, cap + 1) if B % d == 0)
    # Patch chunk: multiple of 128 lanes, sized so one bf16 stream buffer is
    # ~<= 2 MiB (double-buffered stream + weights + scratch stays well under
    # the 32 MiB scoped-VMEM default, which also fits v7x's 64 MiB physical).
    p128 = ((P + 127) // 128) * 128
    budget = 2 * 1024 * 1024
    pc_cap = (budget // (tb * K * 2)) // 128 * 128
    pc = max(128, min(2048, pc_cap, p128))
    p_pad = ((P + pc - 1) // pc) * pc          # zero-pad: safe for a SUM
    return tb, pc, p_pad


def extract_patches_kp(x, patch=4):
    """NCHW image -> [B, C*patch*patch, P] with the patch index on lanes."""
    B, C, H, W = x.shape
    x = x.reshape(B, C, H // patch, patch, W // patch, patch)
    x = x.transpose(0, 1, 3, 5, 2, 4)            # B, C, ph, pw, Hp, Wp
    return x.reshape(B, C * patch * patch, (H // patch) * (W // patch))


def init_params(key, num_classes, in_channels=3, patch=4,
                feat=768, d=512, hid=256):
    K = in_channels * patch * patch
    ks = jax.random.split(key, 6)
    n = lambda k, s: (0.02 * jax.random.normal(k, s)).astype(jnp.float32)
    z = lambda s: jnp.zeros(s, jnp.float32)

    # swin backbone surrogate stem (produces the 768-d feature contract)
    wstem, bstem = n(ks[0], (K, feat)), z((1, feat))

    # swin_proj (768->512) and MultiheadAttention value / output projections.
    wsp, bsp = n(ks[1], (feat, d)), z((1, d))
    wv, bv = n(ks[2], (d, d)), z((1, d))
    wo, bo = n(ks[3], (d, d)), z((1, d))
    # seq_len == 1 => attention weights are identically 1; fold the linear chain.
    wvo = wsp @ wv @ wo                                   # [768, 512]
    bvo = (bsp @ wv + bv) @ wo + bo                       # [1, 512]

    # classifier
    w1, b1 = n(ks[4], (d, hid)), z((1, hid))
    gamma, beta = jnp.ones((1, hid), jnp.float32), z((1, hid))
    ncp = ((num_classes + 127) // 128) * 128              # lane-dense padding
    w2 = jnp.zeros((hid, ncp), jnp.float32).at[:, :num_classes].set(
        n(ks[5], (hid, num_classes)))
    b2 = z((1, ncp))

    bf = lambda a: a.astype(jnp.bfloat16)
    return dict(
        wstem=bf(wstem), bstem=bstem,
        wvo=bf(wvo), bvo=bvo,
        w1=bf(w1), b1=b1, gamma=gamma, beta=beta,
        w2=bf(w2), b2=b2,
    )


def convnext_swin_forward(x, params, num_classes):
    B, C, H, W = x.shape
    patch = 4
    P = (H // patch) * (W // patch)
    K = C * patch * patch
    NCP = params["w2"].shape[1]

    TB, PC, P_pad = _choose_tiles(B, K, P)

    # TODO(synk): in a production pipeline the producer should emit this bf16
    # [B, K, P] layout directly (or the kernel should gather the NCHW image
    # via manual DMA) so the image is not re-read by a separate relayout pass.
    patches = extract_patches_kp(x, patch)
    if P_pad != P:
        patches = jnp.pad(patches, ((0, 0), (0, 0), (0, P_pad - P)))
    patches = patches.astype(jnp.bfloat16)                  # [B, K, P_pad]

    out_padded = pl.pallas_call(
        functools.partial(_fused_kernel,
                          inv_num_patches=1.0 / float(P),
                          lane_blocks=PC // 128),
        out_shape=jax.ShapeDtypeStruct((B, 1, NCP), jnp.float32),
        grid=(B // TB, P_pad // PC),
        in_specs=[
            pl.BlockSpec((TB, K, PC), lambda i, j: (i, 0, j)),   # patch stream
            _full_spec(params["wstem"].shape),
            _full_spec(params["bstem"].shape),
            _full_spec(params["wvo"].shape),
            _full_spec(params["bvo"].shape),
            _full_spec(params["w1"].shape),
            _full_spec(params["b1"].shape),
            _full_spec(params["gamma"].shape),
            _full_spec(params["beta"].shape),
            _full_spec(params["w2"].shape),
            _full_spec(params["b2"].shape),
        ],
        out_specs=pl.BlockSpec((TB, 1, NCP), lambda i, j: (i, 0, 0)),
        scratch_shapes=[pltpu.VMEM((TB, K, 128), jnp.float32)],
        compiler_params=pltpu.CompilerParams(
            dimension_semantics=("parallel", "arbitrary"),
            vmem_limit_bytes=32 * 1024 * 1024),
    )(patches, params["wstem"], params["bstem"],
      params["wvo"], params["bvo"],
      params["w1"], params["b1"], params["gamma"], params["beta"],
      params["w2"], params["b2"])

    return out_padded[:, 0, :num_classes]


# ----------------------------------------------------------------------------
if __name__ == "__main__":
    B, C, H, W = 2, 3, 16, 16
    NUM_CLASSES = 10

    key = jax.random.PRNGKey(0)
    kx, kp = jax.random.split(key)
    x = jax.random.normal(kx, (B, C, H, W), dtype=jnp.float32)
    params = init_params(kp, NUM_CLASSES, in_channels=C)

    out = convnext_swin_forward(x, params, NUM_CLASSES)
    out = jax.block_until_ready(out)
    assert out.shape == (B, NUM_CLASSES), out.shape
    assert out.dtype == jnp.float32
    assert bool(jnp.all(jnp.isfinite(out)))
    print("KERNEL_OK")
</pallas_src>

<mosaic_0001>
module attributes {stable_mosaic.version = 11 : i64} {
  func.func @_fused_kernel(%arg0: i32, %arg1: i32, %arg2: memref<1x48x128xbf16, #tpu.memory_space<vmem>>, %arg3: memref<48x768xbf16, #tpu.memory_space<vmem>>, %arg4: memref<1x768xf32, #tpu.memory_space<vmem>>, %arg5: memref<768x512xbf16, #tpu.memory_space<vmem>>, %arg6: memref<1x512xf32, #tpu.memory_space<vmem>>, %arg7: memref<512x256xbf16, #tpu.memory_space<vmem>>, %arg8: memref<1x256xf32, #tpu.memory_space<vmem>>, %arg9: memref<1x256xf32, #tpu.memory_space<vmem>>, %arg10: memref<1x256xf32, #tpu.memory_space<vmem>>, %arg11: memref<256x128xbf16, #tpu.memory_space<vmem>>, %arg12: memref<1x128xf32, #tpu.memory_space<vmem>>, %arg13: memref<1x1x128xf32, #tpu.memory_space<vmem>>, %arg14: memref<1x48x128xf32, #tpu.memory_space<vmem>>) attributes {dimension_semantics = [#tpu.dimension_semantics<parallel>, #tpu.dimension_semantics<arbitrary>], iteration_bounds = array<i64: 2, 1>, scalar_prefetch = 0 : i64, scratch_operands = 1 : i64, tpu.core_type = #tpu.core_type<tc>, window_params = [{transform_indices = @transform_0, window_bounds = array<i64: 1, 48, 128>}, {pipeline_mode = #tpu.pipeline_mode<synchronous>, transform_indices = @transform_1, window_bounds = array<i64: 48, 768>}, {pipeline_mode = #tpu.pipeline_mode<synchronous>, transform_indices = @transform_2, window_bounds = array<i64: 1, 768>}, {pipeline_mode = #tpu.pipeline_mode<synchronous>, transform_indices = @transform_3, window_bounds = array<i64: 768, 512>}, {pipeline_mode = #tpu.pipeline_mode<synchronous>, transform_indices = @transform_4, window_bounds = array<i64: 1, 512>}, {pipeline_mode = #tpu.pipeline_mode<synchronous>, transform_indices = @transform_5, window_bounds = array<i64: 512, 256>}, {pipeline_mode = #tpu.pipeline_mode<synchronous>, transform_indices = @transform_6, window_bounds = array<i64: 1, 256>}, {pipeline_mode = #tpu.pipeline_mode<synchronous>, transform_indices = @transform_7, window_bounds = array<i64: 1, 256>}, {pipeline_mode = #tpu.pipeline_mode<synchronous>, transform_indices = @transform_8, window_bounds = array<i64: 1, 256>}, {pipeline_mode = #tpu.pipeline_mode<synchronous>, transform_indices = @transform_9, window_bounds = array<i64: 256, 128>}, {pipeline_mode = #tpu.pipeline_mode<synchronous>, transform_indices = @transform_10, window_bounds = array<i64: 1, 128>}, {transform_indices = @transform_11, window_bounds = array<i64: 1, 1, 128>}]} {
    %c0_i32 = arith.constant 0 : i32
    %0 = arith.cmpi eq, %arg1, %c0_i32 : i32
    %1 = arith.extui %0 : i1 to i32
    %c0_i32_0 = arith.constant 0 : i32
    %2 = arith.cmpi ne, %1, %c0_i32_0 : i32
    scf.if %2 {
      %cst = arith.constant 0.000000e+00 : f32
      %11 = vector.broadcast %cst : f32 to vector<1x48x128xf32>
      %c0_11 = arith.constant 0 : index
      %c0_12 = arith.constant 0 : index
      %c0_13 = arith.constant 0 : index
      %12 = vector.load %arg14[%c0_11, %c0_12, %c0_13] : memref<1x48x128xf32, #tpu.memory_space<vmem>>, vector<1x48x128xf32>
      tpu.vector_store %arg14[%c0_11, %c0_12, %c0_13], %11 {strides = array<i32>} : memref<1x48x128xf32, #tpu.memory_space<vmem>>, vector<1x48x128xf32>,
    } else {
    }
    %c0 = arith.constant 0 : index
    %c0_1 = arith.constant 0 : index
    %c0_2 = arith.constant 0 : index
    %3 = vector.load %arg2[%c0, %c0_1, %c0_2] : memref<1x48x128xbf16, #tpu.memory_space<vmem>>, vector<1x48x128xbf16>
    %4 = arith.extf %3 : vector<1x48x128xbf16> to vector<1x48x128xf32>
    %c0_3 = arith.constant 0 : index
    %c0_4 = arith.constant 0 : index
    %c0_5 = arith.constant 0 : index
    %5 = vector.load %arg14[%c0_3, %c0_4, %c0_5] : memref<1x48x128xf32, #tpu.memory_space<vmem>>, vector<1x48x128xf32>
    %6 = arith.addf %5, %4 : vector<1x48x128xf32>
    %c0_6 = arith.constant 0 : index
    %c0_7 = arith.constant 0 : index
    %c0_8 = arith.constant 0 : index
    %7 = vector.load %arg14[%c0_6, %c0_7, %c0_8] : memref<1x48x128xf32, #tpu.memory_space<vmem>>, vector<1x48x128xf32>
    tpu.vector_store %arg14[%c0_6, %c0_7, %c0_8], %6 {strides = array<i32>} : memref<1x48x128xf32, #tpu.memory_space<vmem>>, vector<1x48x128xf32>,
    %c0_i32_9 = arith.constant 0 : i32
    %8 = arith.cmpi eq, %arg1, %c0_i32_9 : i32
    %9 = arith.extui %8 : i1 to i32
    %c0_i32_10 = arith.constant 0 : i32
    %10 = arith.cmpi ne, %9, %c0_i32_10 : i32
    scf.if %10 {
      %c0_11 = arith.constant 0 : index
      %c0_12 = arith.constant 0 : index
      %c0_13 = arith.constant 0 : index
      %11 = vector.load %arg14[%c0_11, %c0_12, %c0_13] : memref<1x48x128xf32, #tpu.memory_space<vmem>>, vector<1x48x128xf32>
      %cst = arith.constant dense<0.000000e+00> : vector<1x48xf32>
      %12 = vector.multi_reduction <add>, %11, %cst [2] : vector<1x48x128xf32> to vector<1x48xf32>
      %cst_14 = arith.constant 6.250000e-02 : f32
      %13 = vector.broadcast %cst_14 : f32 to vector<1x48xf32>
      %14 = arith.mulf %12, %13 : vector<1x48xf32>
      %15 = arith.truncf %14 : vector<1x48xf32> to vector<1x48xbf16>
      %c0_15 = arith.constant 0 : index
      %c0_16 = arith.constant 0 : index
      %16 = vector.load %arg3[%c0_15, %c0_16] : memref<48x768xbf16, #tpu.memory_space<vmem>>, vector<48x768xbf16>
      %cst_17 = arith.constant dense<0.000000e+00> : vector<1x768xf32>
      %17 = tpu.matmul %15, %16, %cst_17 {dimension_numbers = #tpu.dot_dimension_numbers<[1], [0], [0], [1], [0, 0, 1, 1], [], []>} : vector<1x48xbf16>, vector<48x768xbf16>, vector<1x768xf32> -> vector<1x768xf32>
      %c0_18 = arith.constant 0 : index
      %c0_19 = arith.constant 0 : index
      %18 = vector.load %arg4[%c0_18, %c0_19] : memref<1x768xf32, #tpu.memory_space<vmem>>, vector<1x768xf32>
      %19 = arith.addf %17, %18 : vector<1x768xf32>
      %20 = arith.truncf %19 : vector<1x768xf32> to vector<1x768xbf16>
      %c0_20 = arith.constant 0 : index
      %c0_21 = arith.constant 0 : index
      %21 = vector.load %arg5[%c0_20, %c0_21] : memref<768x512xbf16, #tpu.memory_space<vmem>>, vector<768x512xbf16>
      %cst_22 = arith.constant dense<0.000000e+00> : vector<1x512xf32>
      %22 = tpu.matmul %20, %21, %cst_22 {dimension_numbers = #tpu.dot_dimension_numbers<[1], [0], [0], [1], [0, 0, 1, 1], [], []>} : vector<1x768xbf16>, vector<768x512xbf16>, vector<1x512xf32> -> vector<1x512xf32>
      %c0_23 = arith.constant 0 : index
      %c0_24 = arith.constant 0 : index
      %23 = vector.load %arg6[%c0_23, %c0_24] : memref<1x512xf32, #tpu.memory_space<vmem>>, vector<1x512xf32>
      %24 = arith.addf %22, %23 : vector<1x512xf32>
      %25 = arith.truncf %24 : vector<1x512xf32> to vector<1x512xbf16>
      %c0_25 = arith.constant 0 : index
      %c0_26 = arith.constant 0 : index
      %26 = vector.load %arg7[%c0_25, %c0_26] : memref<512x256xbf16, #tpu.memory_space<vmem>>, vector<512x256xbf16>
      %cst_27 = arith.constant dense<0.000000e+00> : vector<1x256xf32>
      %27 = tpu.matmul %25, %26, %cst_27 {dimension_numbers = #tpu.dot_dimension_numbers<[1], [0], [0], [1], [0, 0, 1, 1], [], []>} : vector<1x512xbf16>, vector<512x256xbf16>, vector<1x256xf32> -> vector<1x256xf32>
      %c0_28 = arith.constant 0 : index
      %c0_29 = arith.constant 0 : index
      %28 = vector.load %arg8[%c0_28, %c0_29] : memref<1x256xf32, #tpu.memory_space<vmem>>, vector<1x256xf32>
      %29 = arith.addf %27, %28 : vector<1x256xf32>
      %cst_30 = arith.constant dense<0.000000e+00> : vector<1xf32>
      %30 = vector.multi_reduction <add>, %29, %cst_30 [1] : vector<1x256xf32> to vector<1xf32>
      %31 = vector.shape_cast %30 : vector<1xf32> to vector<1x1xf32>
      %cst_31 = arith.constant 2.560000e+02 : f32
      %32 = vector.broadcast %cst_31 : f32 to vector<1x1xf32>
      %33 = arith.divf %31, %32 : vector<1x1xf32>
      %34 = vector.broadcast %33 : vector<1x1xf32> to vector<1x256xf32>
      %35 = arith.subf %29, %34 : vector<1x256xf32>
      %36 = vector.broadcast %33 : vector<1x1xf32> to vector<1x256xf32>
      %37 = arith.subf %29, %36 : vector<1x256xf32>
      %38 = arith.mulf %35, %37 : vector<1x256xf32>
      %cst_32 = arith.constant dense<0.000000e+00> : vector<1xf32>
      %39 = vector.multi_reduction <add>, %38, %cst_32 [1] : vector<1x256xf32> to vector<1xf32>
      %40 = vector.shape_cast %39 : vector<1xf32> to vector<1x1xf32>
      %cst_33 = arith.constant 2.560000e+02 : f32
      %41 = vector.broadcast %cst_33 : f32 to vector<1x1xf32>
      %42 = arith.divf %40, %41 : vector<1x1xf32>
      %43 = vector.broadcast %33 : vector<1x1xf32> to vector<1x256xf32>
      %44 = arith.subf %29, %43 : vector<1x256xf32>
      %cst_34 = arith.constant 9.99999974E-6 : f32
      %45 = vector.broadcast %cst_34 : f32 to vector<1x1xf32>
      %46 = arith.addf %42, %45 : vector<1x1xf32>
      %47 = math.rsqrt %46 : vector<1x1xf32>
      %48 = vector.broadcast %47 : vector<1x1xf32> to vector<1x256xf32>
      %49 = arith.mulf %44, %48 : vector<1x256xf32>
      %c0_35 = arith.constant 0 : index
      %c0_36 = arith.constant 0 : index
      %50 = vector.load %arg9[%c0_35, %c0_36] : memref<1x256xf32, #tpu.memory_space<vmem>>, vector<1x256xf32>
      %51 = arith.mulf %49, %50 : vector<1x256xf32>
      %c0_37 = arith.constant 0 : index
      %c0_38 = arith.constant 0 : index
      %52 = vector.load %arg10[%c0_37, %c0_38] : memref<1x256xf32, #tpu.memory_space<vmem>>, vector<1x256xf32>
      %53 = arith.addf %51, %52 : vector<1x256xf32>
      %cst_39 = arith.constant 0.000000e+00 : f32
      %54 = vector.broadcast %cst_39 : f32 to vector<1x256xf32>
      %55 = arith.maximumf %53, %54 : vector<1x256xf32>
      %56 = arith.truncf %55 : vector<1x256xf32> to vector<1x256xbf16>
      %c0_40 = arith.constant 0 : index
      %c0_41 = arith.constant 0 : index
      %57 = vector.load %arg11[%c0_40, %c0_41] : memref<256x128xbf16, #tpu.memory_space<vmem>>, vector<256x128xbf16>
      %cst_42 = arith.constant dense<0.000000e+00> : vector<1x128xf32>
      %58 = tpu.matmul %56, %57, %cst_42 {dimension_numbers = #tpu.dot_dimension_numbers<[1], [0], [0], [1], [0, 0, 1, 1], [], []>} : vector<1x256xbf16>, vector<256x128xbf16>, vector<1x128xf32> -> vector<1x128xf32>
      %c0_43 = arith.constant 0 : index
      %c0_44 = arith.constant 0 : index
      %59 = vector.load %arg12[%c0_43, %c0_44] : memref<1x128xf32, #tpu.memory_space<vmem>>, vector<1x128xf32>
      %60 = arith.addf %58, %59 : vector<1x128xf32>
      %61 = vector.shape_cast %60 : vector<1x128xf32> to vector<1x1x128xf32>
      %c0_45 = arith.constant 0 : index
      %c0_46 = arith.constant 0 : index
      %c0_47 = arith.constant 0 : index
      %62 = vector.load %arg13[%c0_45, %c0_46, %c0_47] : memref<1x1x128xf32, #tpu.memory_space<vmem>>, vector<1x1x128xf32>
      tpu.vector_store %arg13[%c0_45, %c0_46, %c0_47], %61 {strides = array<i32>} : memref<1x1x128xf32, #tpu.memory_space<vmem>>, vector<1x1x128xf32>,
    } else {
    }
    return
  }
  func.func @transform_0(%arg0: i32, %arg1: i32) -> (i32, i32, i32) {
    %c0_i32 = arith.constant 0 : i32
    %c0_i32_0 = arith.constant 0 : i32
    return %arg0, %c0_i32, %arg1 : i32, i32, i32
  }
  func.func @transform_1(%arg0: i32, %arg1: i32) -> (i32, i32) {
    %c0_i32 = arith.constant 0 : i32
    %c0_i32_0 = arith.constant 0 : i32
    %c0_i32_1 = arith.constant 0 : i32
    return %c0_i32, %c0_i32_0 : i32, i32
  }
  func.func @transform_2(%arg0: i32, %arg1: i32) -> (i32, i32) {
    %c0_i32 = arith.constant 0 : i32
    %c0_i32_0 = arith.constant 0 : i32
    %c0_i32_1 = arith.constant 0 : i32
    return %c0_i32, %c0_i32_0 : i32, i32
  }
  func.func @transform_3(%arg0: i32, %arg1: i32) -> (i32, i32) {
    %c0_i32 = arith.constant 0 : i32
    %c0_i32_0 = arith.constant 0 : i32
    %c0_i32_1 = arith.constant 0 : i32
    return %c0_i32, %c0_i32_0 : i32, i32
  }
  func.func @transform_4(%arg0: i32, %arg1: i32) -> (i32, i32) {
    %c0_i32 = arith.constant 0 : i32
    %c0_i32_0 = arith.constant 0 : i32
    %c0_i32_1 = arith.constant 0 : i32
    return %c0_i32, %c0_i32_0 : i32, i32
  }
  func.func @transform_5(%arg0: i32, %arg1: i32) -> (i32, i32) {
    %c0_i32 = arith.constant 0 : i32
    %c0_i32_0 = arith.constant 0 : i32
    %c0_i32_1 = arith.constant 0 : i32
    return %c0_i32, %c0_i32_0 : i32, i32
  }
  func.func @transform_6(%arg0: i32, %arg1: i32) -> (i32, i32) {
    %c0_i32 = arith.constant 0 : i32
    %c0_i32_0 = arith.constant 0 : i32
    %c0_i32_1 = arith.constant 0 : i32
    return %c0_i32, %c0_i32_0 : i32, i32
  }
  func.func @transform_7(%arg0: i32, %arg1: i32) -> (i32, i32) {
    %c0_i32 = arith.constant 0 : i32
    %c0_i32_0 = arith.constant 0 : i32
    %c0_i32_1 = arith.constant 0 : i32
    return %c0_i32, %c0_i32_0 : i32, i32
  }
  func.func @transform_8(%arg0: i32, %arg1: i32) -> (i32, i32) {
    %c0_i32 = arith.constant 0 : i32
    %c0_i32_0 = arith.constant 0 : i32
    %c0_i32_1 = arith.constant 0 : i32
    return %c0_i32, %c0_i32_0 : i32, i32
  }
  func.func @transform_9(%arg0: i32, %arg1: i32) -> (i32, i32) {
    %c0_i32 = arith.constant 0 : i32
    %c0_i32_0 = arith.constant 0 : i32
    %c0_i32_1 = arith.constant 0 : i32
    return %c0_i32, %c0_i32_0 : i32, i32
  }
  func.func @transform_10(%arg0: i32, %arg1: i32) -> (i32, i32) {
    %c0_i32 = arith.constant 0 : i32
    %c0_i32_0 = arith.constant 0 : i32
    %c0_i32_1 = arith.constant 0 : i32
    return %c0_i32, %c0_i32_0 : i32, i32
  }
  func.func @transform_11(%arg0: i32, %arg1: i32) -> (i32, i32, i32) {
    %c0_i32 = arith.constant 0 : i32
    %c0_i32_0 = arith.constant 0 : i32
    %c0_i32_1 = arith.constant 0 : i32
    return %arg0, %c0_i32, %c0_i32_0 : i32, i32, i32
  }
}

</mosaic_0001>

<llo_original>
// kernel: tpu_custom_call.1
$region0: #{tpu_custom_call.1}
  #allocation0 [shape = 'u32[]', space=smem, size = 0x4, offset = 0x4, fixed_abs, tag = 'smem constant byte address 0x4 - core index']
  #allocation1 [shape = 'u32[144,128]{1,0:T(1,128)}', space=vmem, size = 0x12000, scoped, tag = 'internal scratch']
  #allocation2 [shape = 'f32[1,48,128]{2,1,0:T(8,128)}', space=vmem, size = 0x6000, scoped, tag = 'scratch operand']
  %s0 = inlined_call_operand.hbm [shape: bf16[2,48,128], index: 0, kind: input, shape index: {}]
  %s1 = inlined_call_operand.hbm [shape: bf16[48,768], index: 1, kind: input, shape index: {}]
  %s2 = inlined_call_operand.hbm [shape: f32[1,768], index: 2, kind: input, shape index: {}]
  %s3 = inlined_call_operand.hbm [shape: bf16[768,512], index: 3, kind: input, shape index: {}]
  %s4 = inlined_call_operand.vmem [shape: f32[1,512], index: 4, kind: input, shape index: {}]
  %s5 = inlined_call_operand.hbm [shape: bf16[512,256], index: 5, kind: input, shape index: {}]
  %s6 = inlined_call_operand.vmem [shape: f32[1,256], index: 6, kind: input, shape index: {}]
  %s7 = inlined_call_operand.vmem [shape: f32[1,256], index: 7, kind: input, shape index: {}]
  %s8 = inlined_call_operand.vmem [shape: f32[1,256], index: 8, kind: input, shape index: {}]
  %s9 = inlined_call_operand.hbm [shape: bf16[256,128], index: 9, kind: input, shape index: {}]
  %s10 = inlined_call_operand.vmem [shape: f32[1,128], index: 10, kind: input, shape index: {}]
  %s11 = inlined_call_operand.hbm [shape: f32[2,1,128], index: 11, kind: output, shape index: {}]
  %s12 = sld [smem:[#allocation0]]
  $region109: #{tpu_custom_call.1} parent=0
    _
  %s14 = ssub.s32 1, %s12
  %s15 = scalar_select 0, %s14, %s12
  $region1: #{tpu_custom_call.1} parent=0
    #allocation3 [shape = 'u8[24576]{0}', space=vmem, size = 0x6000, scoped, tag = 'input window, operand 0']
    #allocation4 [shape = 's32[2]{0}', space=sflag, size = 0x8, scoped, tag = 'scoped memory for tpu_custom_call.1']
    #allocation5 [shape = 's32[2]{0}', space=sflag, size = 0x8, scoped, tag = 'scoped memory for tpu_custom_call.1']
    #allocation6 [shape = 'u8[73728]{0}', space=vmem, size = 0x12000, scoped, tag = 'input window, operand 1, single buffered']
    #allocation7 [shape = 's32[1]{0}', space=sflag, size = 0x4, scoped, tag = 'scoped memory for tpu_custom_call.1']
    #allocation8 [shape = 'u8[3072]{0}', space=vmem, size = 0xc00, scoped, tag = 'input window, operand 2, single buffered']
    #allocation9 [shape = 'u8[786432]{0}', space=vmem, size = 0xc0000, scoped, tag = 'input window, operand 3, single buffered']
    #allocation10 [shape = 's32[1]{0}', space=sflag, size = 0x4, scoped, tag = 'scoped memory for tpu_custom_call.1']
    #allocation11 [shape = 'u8[262144]{0}', space=vmem, size = 0x40000, scoped, tag = 'input window, operand 5, single buffered']
    #allocation12 [shape = 'u8[65536]{0}', space=vmem, size = 0x10000, scoped, tag = 'input window, operand 9, single buffered']
    #allocation13 [shape = 's32[1]{0}', space=sflag, size = 0x4, scoped, tag = 'scoped memory for tpu_custom_call.1']
    #allocation14 [shape = 'u8[1024]{0}', space=vmem, size = 0x400, scoped, tag = 'output window, operand 0']
    %16 = vsyncpa [#allocation4], 0
    %s17 = scalar_lea.sflag [#allocation4], 1
    %18 = vsyncpa %s17, 0
    %19 = vsyncpa [#allocation7], 0
    %20 = vsyncpa [#allocation10], 0
    %21 = vsyncpa [#allocation13], 0
    %22 = vsyncpa [#allocation5], 0
    %s23 = scalar_lea.sflag [#allocation5], 1
    %24 = vsyncpa %s23, 0
    loop: start=0, step=1, limit=4
    $region2: #{tpu_custom_call.1} parent=1 // loop_pre_header
      _
    $region3: #{tpu_custom_call.1} parent=1 // loop_header
      %s26 = sphi 0, %s30
      %p27 = scmp.ge.s32.totalorder %s26, 4
      %s33 = sphi 0, %s45
      %s34 = sphi 0, %s41
      %s35 = sphi 0, %s33
      %s36 = sphi 0, %s34
      %s37 = sphi 0, %s35
      %s38 = sphi 0, %s36
      %s50 = sphi 0, %s52
      %s53 = sphi 0, %s50
      %s54 = sphi 0, %s53
      %s70 = sphi 0, %s54
      %s74 = sphi 0, %s74
      %s76 = sphi 0, %s74
      %s77 = sphi 0, %s76
      %s91 = sphi 0, %s77
      %s95 = sphi 0, %s95
      %s97 = sphi 0, %s95
      %s98 = sphi 0, %s97
      %s112 = sphi 0, %s98
      %s116 = sphi 0, %s116
      %s118 = sphi 0, %s116
      %s119 = sphi 0, %s118
      %s133 = sphi 0, %s119
      %s137 = sphi 0, %s137
      %s139 = sphi 0, %s137
      %s140 = sphi 0, %s139
      %s154 = sphi 0, %s140
      %s158 = sphi 0, %s158
      %s160 = sphi 0, %s158
      %s161 = sphi 0, %s160
      %s175 = sphi 0, %s161
      %s179 = sphi 0, %s179
      %s181 = sphi 0, %s179
      %s182 = sphi 0, %s181
      %s196 = sphi 0, %s182
      %s200 = sphi 0, %s200
      %s202 = sphi 0, %s200
      %s203 = sphi 0, %s202
      %s217 = sphi 0, %s203
      %s221 = sphi 0, %s221
      %s223 = sphi 0, %s221
      %s224 = sphi 0, %s223
      %s238 = sphi 0, %s224
      %s242 = sphi 0, %s242
      %s244 = sphi 0, %s242
      %s245 = sphi 0, %s244
      %s259 = sphi 0, %s245
      %s263 = sphi 0, %s263
      %s265 = sphi 0, %s263
      %s266 = sphi 0, %s265
      %s280 = sphi 0, %s266
      %s286 = sphi 0, %s288
      %s289 = sphi 0, %s286
      %s290 = sphi 0, %s289
      %s306 = sphi 0, %s290
    $region4: #{tpu_custom_call.1} parent=1 // loop_header_branch
      %29 = sbr.rel (%p27) target = $region8
    $region5: #{tpu_custom_call.1} parent=1 // loop_body
      %s31 = ssub.s32 %s26, 1
      %s32 = ssub.s32 %s26, 2
      %s39 = sadd.s32 1, %s34
      %p40 = scmp.ge.s32.totalorder %s39, 1
      %s41 = scalar_select %p40, 0, %s39
      %s42 = sadd.s32 1, %s33
      %s43 = scalar_select %p40, %s42, %s33
      %p44 = scmp.ge.s32.totalorder %s43, 2
      %s45 = scalar_select %p44, 0, %s43
      %s46 = ssub.s32 %s33, %s45
      %s47 = ssub.s32 %s34, %s41
      %s48 = sor.u32 %s46, %s47
      %p49 = scmp.eq.s32.totalorder %s48, 0
      %s51 = sadd.s32 %s50, 1
      %s52 = scalar_select %p49, %s50, %s51
      %p55 = pneg %p49
      %p56 = scmp.eq.s32.totalorder %s26, 1
      %p57 = por %p55, %p56
      %p58 = scmp.ne.s32.totalorder %s50, %s53
      %p59 = scmp.eq.s32.totalorder %s26, 0
      %p60 = por %p58, %p59
      %p61 = scmp.ne.s32.totalorder %s50, %s53
      %p62 = scmp.eq.s32.totalorder %s31, 1
      %p63 = por %p61, %p62
      %p64 = scmp.ne.s32.totalorder %s53, %s54
      %p65 = scmp.eq.s32.totalorder %s31, 0
      %p66 = por %p64, %p65
      %p67 = scmp.ne.s32.totalorder %s53, %s54
      %p68 = scmp.eq.s32.totalorder %s32, 1
      %p69 = por %p67, %p68
      %p71 = scmp.ne.s32.totalorder %s54, %s70
      %p72 = scmp.eq.s32.totalorder %s32, 0
      %p73 = por %p71, %p72
      %s75 = sadd.s32 %s74, 1
      %p78 = scmp.eq.s32.totalorder %s26, 1
      %p79 = scmp.ne.s32.totalorder %s74, %s76
      %p80 = scmp.eq.s32.totalorder %s26, 0
      %p81 = por %p79, %p80
      %p82 = scmp.ne.s32.totalorder %s74, %s76
      %p83 = scmp.eq.s32.totalorder %s31, 1
      %p84 = por %p82, %p83
      %p85 = scmp.ne.s32.totalorder %s76, %s77
      %p86 = scmp.eq.s32.totalorder %s31, 0
      %p87 = por %p85, %p86
      %p88 = scmp.ne.s32.totalorder %s76, %s77
      %p89 = scmp.eq.s32.totalorder %s32, 1
      %p90 = por %p88, %p89
      %p92 = scmp.ne.s32.totalorder %s77, %s91
      %p93 = scmp.eq.s32.totalorder %s32, 0
      %p94 = por %p92, %p93
      %s96 = sadd.s32 %s95, 1
      %p99 = scmp.eq.s32.totalorder %s26, 1
      %p100 = scmp.ne.s32.totalorder %s95, %s97
      %p101 = scmp.eq.s32.totalorder %s26, 0
      %p102 = por %p100, %p101
      %p103 = scmp.ne.s32.totalorder %s95, %s97
      %p104 = scmp.eq.s32.totalorder %s31, 1
      %p105 = por %p103, %p104
      %p106 = scmp.ne.s32.totalorder %s97, %s98
      %p107 = scmp.eq.s32.totalorder %s31, 0
      %p108 = por %p106, %p107
      %p109 = scmp.ne.s32.totalorder %s97, %s98
      %p110 = scmp.eq.s32.totalorder %s32, 1
      %p111 = por %p109, %p110
      %p113 = scmp.ne.s32.totalorder %s98, %s112
      %p114 = scmp.eq.s32.totalorder %s32, 0
      %p115 = por %p113, %p114
      %s117 = sadd.s32 %s116, 1
      %p120 = scmp.eq.s32.totalorder %s26, 1
      %p121 = scmp.ne.s32.totalorder %s116, %s118
      %p122 = scmp.eq.s32.totalorder %s26, 0
      %p123 = por %p121, %p122
      %p124 = scmp.ne.s32.totalorder %s116, %s118
      %p125 = scmp.eq.s32.totalorder %s31, 1
      %p126 = por %p124, %p125
      %p127 = scmp.ne.s32.totalorder %s118, %s119
      %p128 = scmp.eq.s32.totalorder %s31, 0
      %p129 = por %p127, %p128
      %p130 = scmp.ne.s32.totalorder %s118, %s119
      %p131 = scmp.eq.s32.totalorder %s32, 1
      %p132 = por %p130, %p131
      %p134 = scmp.ne.s32.totalorder %s119, %s133
      %p135 = scmp.eq.s32.totalorder %s32, 0
      %p136 = por %p134, %p135
      %s138 = sadd.s32 %s137, 1
      %p141 = scmp.eq.s32.totalorder %s26, 1
      %p142 = scmp.ne.s32.totalorder %s137, %s139
      %p143 = scmp.eq.s32.totalorder %s26, 0
      %p144 = por %p142, %p143
      %p145 = scmp.ne.s32.totalorder %s137, %s139
      %p146 = scmp.eq.s32.totalorder %s31, 1
      %p147 = por %p145, %p146
      %p148 = scmp.ne.s32.totalorder %s139, %s140
      %p149 = scmp.eq.s32.totalorder %s31, 0
      %p150 = por %p148, %p149
      %p151 = scmp.ne.s32.totalorder %s139, %s140
      %p152 = scmp.eq.s32.totalorder %s32, 1
      %p153 = por %p151, %p152
      %p155 = scmp.ne.s32.totalorder %s140, %s154
      %p156 = scmp.eq.s32.totalorder %s32, 0
      %p157 = por %p155, %p156
      %s159 = sadd.s32 %s158, 1
      %p162 = scmp.eq.s32.totalorder %s26, 1
      %p163 = scmp.ne.s32.totalorder %s158, %s160
      %p164 = scmp.eq.s32.totalorder %s26, 0
      %p165 = por %p163, %p164
      %p166 = scmp.ne.s32.totalorder %s158, %s160
      %p167 = scmp.eq.s32.totalorder %s31, 1
      %p168 = por %p166, %p167
      %p169 = scmp.ne.s32.totalorder %s160, %s161
      %p170 = scmp.eq.s32.totalorder %s31, 0
      %p171 = por %p169, %p170
      %p172 = scmp.ne.s32.totalorder %s160, %s161
      %p173 = scmp.eq.s32.totalorder %s32, 1
      %p174 = por %p172, %p173
      %p176 = scmp.ne.s32.totalorder %s161, %s175
      %p177 = scmp.eq.s32.totalorder %s32, 0
      %p178 = por %p176, %p177
      %s180 = sadd.s32 %s179, 1
      %p183 = scmp.eq.s32.totalorder %s26, 1
      %p184 = scmp.ne.s32.totalorder %s179, %s181
      %p185 = scmp.eq.s32.totalorder %s26, 0
      %p186 = por %p184, %p185
      %p187 = scmp.ne.s32.totalorder %s179, %s181
      %p188 = scmp.eq.s32.totalorder %s31, 1
      %p189 = por %p187, %p188
      %p190 = scmp.ne.s32.totalorder %s181, %s182
      %p191 = scmp.eq.s32.totalorder %s31, 0
      %p192 = por %p190, %p191
      %p193 = scmp.ne.s32.totalorder %s181, %s182
      %p194 = scmp.eq.s32.totalorder %s32, 1
      %p195 = por %p193, %p194
      %p197 = scmp.ne.s32.totalorder %s182, %s196
      %p198 = scmp.eq.s32.totalorder %s32, 0
      %p199 = por %p197, %p198
      %s201 = sadd.s32 %s200, 1
      %p204 = scmp.eq.s32.totalorder %s26, 1
      %p205 = scmp.ne.s32.totalorder %s200, %s202
      %p206 = scmp.eq.s32.totalorder %s26, 0
      %p207 = por %p205, %p206
      %p208 = scmp.ne.s32.totalorder %s200, %s202
      %p209 = scmp.eq.s32.totalorder %s31, 1
      %p210 = por %p208, %p209
      %p211 = scmp.ne.s32.totalorder %s202, %s203
      %p212 = scmp.eq.s32.totalorder %s31, 0
      %p213 = por %p211, %p212
      %p214 = scmp.ne.s32.totalorder %s202, %s203
      %p215 = scmp.eq.s32.totalorder %s32, 1
      %p216 = por %p214, %p215
      %p218 = scmp.ne.s32.totalorder %s203, %s217
      %p219 = scmp.eq.s32.totalorder %s32, 0
      %p220 = por %p218, %p219
      %s222 = sadd.s32 %s221, 1
      %p225 = scmp.eq.s32.totalorder %s26, 1
      %p226 = scmp.ne.s32.totalorder %s221, %s223
      %p227 = scmp.eq.s32.totalorder %s26, 0
      %p228 = por %p226, %p227
      %p229 = scmp.ne.s32.totalorder %s221, %s223
      %p230 = scmp.eq.s32.totalorder %s31, 1
      %p231 = por %p229, %p230
      %p232 = scmp.ne.s32.totalorder %s223, %s224
      %p233 = scmp.eq.s32.totalorder %s31, 0
      %p234 = por %p232, %p233
      %p235 = scmp.ne.s32.totalorder %s223, %s224
      %p236 = scmp.eq.s32.totalorder %s32, 1
      %p237 = por %p235, %p236
      %p239 = scmp.ne.s32.totalorder %s224, %s238
      %p240 = scmp.eq.s32.totalorder %s32, 0
      %p241 = por %p239, %p240
      %s243 = sadd.s32 %s242, 1
      %p246 = scmp.eq.s32.totalorder %s26, 1
      %p247 = scmp.ne.s32.totalorder %s242, %s244
      %p248 = scmp.eq.s32.totalorder %s26, 0
      %p249 = por %p247, %p248
      %p250 = scmp.ne.s32.totalorder %s242, %s244
      %p251 = scmp.eq.s32.totalorder %s31, 1
      %p252 = por %p250, %p251
      %p253 = scmp.ne.s32.totalorder %s244, %s245
      %p254 = scmp.eq.s32.totalorder %s31, 0
      %p255 = por %p253, %p254
      %p256 = scmp.ne.s32.totalorder %s244, %s245
      %p257 = scmp.eq.s32.totalorder %s32, 1
      %p258 = por %p256, %p257
      %p260 = scmp.ne.s32.totalorder %s245, %s259
      %p261 = scmp.eq.s32.totalorder %s32, 0
      %p262 = por %p260, %p261
      %s264 = sadd.s32 %s263, 1
      %p267 = scmp.eq.s32.totalorder %s26, 1
      %p268 = scmp.ne.s32.totalorder %s263, %s265
      %p269 = scmp.eq.s32.totalorder %s26, 0
      %p270 = por %p268, %p269
      %p271 = scmp.ne.s32.totalorder %s263, %s265
      %p272 = scmp.eq.s32.totalorder %s31, 1
      %p273 = por %p271, %p272
      %p274 = scmp.ne.s32.totalorder %s265, %s266
      %p275 = scmp.eq.s32.totalorder %s31, 0
      %p276 = por %p274, %p275
      %p277 = scmp.ne.s32.totalorder %s265, %s266
      %p278 = scmp.eq.s32.totalorder %s32, 1
      %p279 = por %p277, %p278
      %p281 = scmp.ne.s32.totalorder %s266, %s280
      %p282 = scmp.eq.s32.totalorder %s32, 0
      %p283 = por %p281, %p282
      %s284 = ssub.s32 %s33, %s45
      %p285 = scmp.eq.s32.totalorder %s284, 0
      %s287 = sadd.s32 %s286, 1
      %s288 = scalar_select %p285, %s286, %s287
      %p291 = pneg %p285
      %p292 = scmp.eq.s32.totalorder %s26, 1
      %p293 = por %p291, %p292
      %p294 = scmp.ne.s32.totalorder %s286, %s289
      %p295 = scmp.eq.s32.totalorder %s26, 0
      %p296 = por %p294, %p295
      %p297 = scmp.ne.s32.totalorder %s286, %s289
      %p298 = scmp.eq.s32.totalorder %s31, 1
      %p299 = por %p297, %p298
      %p300 = scmp.ne.s32.totalorder %s289, %s290
      %p301 = scmp.eq.s32.totalorder %s31, 0
      %p302 = por %p300, %p301
      %p303 = scmp.ne.s32.totalorder %s289, %s290
      %p304 = scmp.eq.s32.totalorder %s32, 1
      %p305 = por %p303, %p304
      %p307 = scmp.ne.s32.totalorder %s290, %s306
      %p308 = scmp.eq.s32.totalorder %s32, 0
      %p309 = por %p307, %p308
      %p310 = scmp.le.s32.totalorder 1, %s26
      %p311 = scmp.lt.s32.totalorder %s26, 3
      %p312 = pnand %p310, %p311
      %p313 = pneg %p312
      // Predicated region
      $region9: #{tpu_custom_call.1} parent=5 // pred_check
        _
      $region10: #{tpu_custom_call.1} parent=5 // pred_check_branch
        %315 = sbr.rel (%p312) target = $region12
      $region11: #{tpu_custom_call.1} parent=5 // pred_region
        %s316 = ssub.s32 %s26, 1
        // Predicated region
        $region13: #{tpu_custom_call.1} parent=11 // pred_check
          %p317 = pneg %p87
        $region14: #{tpu_custom_call.1} parent=11 // pred_check_branch
          %319 = sbr.rel (%p317) target = $region16
        $region15: #{tpu_custom_call.1} parent=11 // pred_region
          %s321 = ssub.s32 2304, 2304
          %322 = vsyncadd [#allocation7], %s321
          %s323 = sshll.u32 [#allocation6], 4
          %s324 = int_to_ptr.vmem [resolvable:$true] %s323
          %329 = dma.hbm_to_vmem [thread:$0]  %s1, 2304, %s324, [#allocation7], 384, 384, 24
        $region16: #{tpu_custom_call.1} parent=11 // pred_fallthru
          _
        // Predicated region
        $region17: #{tpu_custom_call.1} parent=11 // pred_check
          %p330 = pneg %p108
        $region18: #{tpu_custom_call.1} parent=11 // pred_check_branch
          %332 = sbr.rel (%p330) target = $region20
        $region19: #{tpu_custom_call.1} parent=11 // pred_region
          %s334 = ssub.s32 96, 96
          %335 = vsyncadd [#allocation7], %s334
          %s337 = sshll.u32 [#allocation8], 4
          %s338 = int_to_ptr.vmem [resolvable:$true] %s337
          %340 = dma.hbm_to_vmem [thread:$0]  %s2, 96, %s338, [#allocation7]
        $region20: #{tpu_custom_call.1} parent=11 // pred_fallthru
          _
        // Predicated region
        $region21: #{tpu_custom_call.1} parent=11 // pred_check
          %p341 = pneg %p129
        $region22: #{tpu_custom_call.1} parent=11 // pred_check_branch
          %343 = sbr.rel (%p341) target = $region24
        $region23: #{tpu_custom_call.1} parent=11 // pred_region
          %s345 = ssub.s32 24576, 24576
          %346 = vsyncadd [#allocation10], %s345
          %s347 = sshll.u32 [#allocation9], 4
          %s348 = int_to_ptr.vmem [resolvable:$true] %s347
          %353 = dma.hbm_to_vmem [thread:$0]  %s3, 24576, %s348, [#allocation10], 256, 256, 16
        $region24: #{tpu_custom_call.1} parent=11 // pred_fallthru
          _
        // Predicated region
        $region25: #{tpu_custom_call.1} parent=11 // pred_check
          %p354 = pneg %p150
        $region26: #{tpu_custom_call.1} parent=11 // pred_check_branch
          %356 = sbr.rel (%p354) target = $region28
        $region27: #{tpu_custom_call.1} parent=11 // pred_region
          _
        $region28: #{tpu_custom_call.1} parent=11 // pred_fallthru
          _
        // Predicated region
        $region29: #{tpu_custom_call.1} parent=11 // pred_check
          %p357 = pneg %p171
        $region30: #{tpu_custom_call.1} parent=11 // pred_check_branch
          %359 = sbr.rel (%p357) target = $region32
        $region31: #{tpu_custom_call.1} parent=11 // pred_region
          %s361 = ssub.s32 8192, 8192
          %362 = vsyncadd [#allocation10], %s361
          %s363 = sshll.u32 [#allocation11], 4
          %s364 = int_to_ptr.vmem [resolvable:$true] %s363
          %369 = dma.hbm_to_vmem [thread:$0]  %s5, 8192, %s364, [#allocation10], 128, 128, 8
        $region32: #{tpu_custom_call.1} parent=11 // pred_fallthru
          _
        // Predicated region
        $region33: #{tpu_custom_call.1} parent=11 // pred_check
          %p370 = pneg %p192
        $region34: #{tpu_custom_call.1} parent=11 // pred_check_branch
          %372 = sbr.rel (%p370) target = $region36
        $region35: #{tpu_custom_call.1} parent=11 // pred_region
          _
        $region36: #{tpu_custom_call.1} parent=11 // pred_fallthru
          _
        // Predicated region
        $region37: #{tpu_custom_call.1} parent=11 // pred_check
          %p373 = pneg %p213
        $region38: #{tpu_custom_call.1} parent=11 // pred_check_branch
          %375 = sbr.rel (%p373) target = $region40
        $region39: #{tpu_custom_call.1} parent=11 // pred_region
          _
        $region40: #{tpu_custom_call.1} parent=11 // pred_fallthru
          _
        // Predicated region
        $region41: #{tpu_custom_call.1} parent=11 // pred_check
          %p376 = pneg %p234
        $region42: #{tpu_custom_call.1} parent=11 // pred_check_branch
          %378 = sbr.rel (%p376) target = $region44
        $region43: #{tpu_custom_call.1} parent=11 // pred_region
          _
        $region44: #{tpu_custom_call.1} parent=11 // pred_fallthru
          _
        // Predicated region
        $region45: #{tpu_custom_call.1} parent=11 // pred_check
          %p379 = pneg %p255
        $region46: #{tpu_custom_call.1} parent=11 // pred_check_branch
          %381 = sbr.rel (%p379) target = $region48
        $region47: #{tpu_custom_call.1} parent=11 // pred_region
          %s383 = ssub.s32 2048, 2048
          %384 = vsyncadd [#allocation13], %s383
          %s385 = sshll.u32 [#allocation12], 4
          %s386 = int_to_ptr.vmem [resolvable:$true] %s385
          %391 = dma.hbm_to_vmem [thread:$0]  %s9, 2048, %s386, [#allocation13], 64, 64, 4
        $region48: #{tpu_custom_call.1} parent=11 // pred_fallthru
          _
        // Predicated region
        $region49: #{tpu_custom_call.1} parent=11 // pred_check
          %p392 = pneg %p276
        $region50: #{tpu_custom_call.1} parent=11 // pred_check_branch
          %394 = sbr.rel (%p392) target = $region52
        $region51: #{tpu_custom_call.1} parent=11 // pred_region
          _
        $region52: #{tpu_custom_call.1} parent=11 // pred_fallthru
          _
      $region12: #{tpu_custom_call.1} parent=5 // pred_fallthru
        _
      %p395 = scmp.lt.s32.totalorder %s26, 2
      // Predicated region
      $region53: #{tpu_custom_call.1} parent=5 // pred_check
        %p396 = pneg %p395
      $region54: #{tpu_custom_call.1} parent=5 // pred_check_branch
        %398 = sbr.rel (%p396) target = $region56
      $region55: #{tpu_custom_call.1} parent=5 // pred_region
        // Predicated region
        $region57: #{tpu_custom_call.1} parent=55 // pred_check
          %p399 = pneg %p60
        $region58: #{tpu_custom_call.1} parent=55 // pred_check_branch
          %401 = sbr.rel (%p399) target = $region60
        $region59: #{tpu_custom_call.1} parent=55 // pred_region
          %s402 = sand.u32 %s50, 1
          %s403 = scalar_lea.sflag [#allocation4], %s402
          %s404 = sand.u32 %s50, 1
          %s405 = smul.addr %s404, 24
          %s406 = scalar_lea.vmem [#allocation3], %s405
          %s408 = ssub.s32 384, 384
          %409 = vsyncadd %s403, %s408
          %s410 = smul.addr %s33, 6
          %s411 = sadd.s32 %s34, %s410
          %s412 = smul.addr %s411, 64
          %s413 = scalar_lea.hbm %s0, %s412
          %s414 = sshll.u32 %s406, 4
          %s415 = int_to_ptr.vmem [resolvable:$true] %s414
          %420 = dma.hbm_to_vmem [thread:$0]  %s413, 384, %s415, %s403, 64, 64, 4
        $region60: #{tpu_custom_call.1} parent=55 // pred_fallthru
          _
      $region56: #{tpu_custom_call.1} parent=5 // pred_fallthru
        _
      %p421 = scmp.le.s32.totalorder 1, %s26
      %p422 = scmp.lt.s32.totalorder %s26, 3
      %p423 = pnand %p421, %p422
      %p424 = pneg %p423
      // Predicated region
      $region61: #{tpu_custom_call.1} parent=5 // pred_check
        _
      $region62: #{tpu_custom_call.1} parent=5 // pred_check_branch
        %426 = sbr.rel (%p423) target = $region64
      $region63: #{tpu_custom_call.1} parent=5 // pred_region
        %s427 = ssub.s32 %s26, 1
        %s428 = sand.u32 %s53, 1
        %s429 = scalar_lea.sflag [#allocation4], %s428
        %s430 = sand.u32 %s53, 1
        %s431 = smul.addr %s430, 24
        %s432 = scalar_lea.vmem [#allocation3], %s431
        // Predicated region
        $region65: #{tpu_custom_call.1} parent=63 // pred_check
          %p433 = pneg %p66
        $region66: #{tpu_custom_call.1} parent=63 // pred_check_branch
          %435 = sbr.rel (%p433) target = $region68
        $region67: #{tpu_custom_call.1} parent=63 // pred_region
          %436 = dma.done %s429, 384
        $region68: #{tpu_custom_call.1} parent=63 // pred_fallthru
          _
        // Predicated region
        $region69: #{tpu_custom_call.1} parent=63 // pred_check
          %p437 = pneg %p87
        $region70: #{tpu_custom_call.1} parent=63 // pred_check_branch
          %439 = sbr.rel (%p437) target = $region72
        $region71: #{tpu_custom_call.1} parent=63 // pred_region
          %440 = dma.done [#allocation7], 2304
        $region72: #{tpu_custom_call.1} parent=63 // pred_fallthru
          _
        // Predicated region
        $region73: #{tpu_custom_call.1} parent=63 // pred_check
          %p441 = pneg %p108
        $region74: #{tpu_custom_call.1} parent=63 // pred_check_branch
          %443 = sbr.rel (%p441) target = $region76
        $region75: #{tpu_custom_call.1} parent=63 // pred_region
          %444 = dma.done [#allocation7], 96
        $region76: #{tpu_custom_call.1} parent=63 // pred_fallthru
          _
        // Predicated region
        $region77: #{tpu_custom_call.1} parent=63 // pred_check
          %p445 = pneg %p129
        $region78: #{tpu_custom_call.1} parent=63 // pred_check_branch
          %447 = sbr.rel (%p445) target = $region80
        $region79: #{tpu_custom_call.1} parent=63 // pred_region
          %448 = dma.done [#allocation10], 24576
        $region80: #{tpu_custom_call.1} parent=63 // pred_fallthru
          _
        // Predicated region
        $region81: #{tpu_custom_call.1} parent=63 // pred_check
          %p449 = pneg %p171
        $region82: #{tpu_custom_call.1} parent=63 // pred_check_branch
          %451 = sbr.rel (%p449) target = $region84
        $region83: #{tpu_custom_call.1} parent=63 // pred_region
          %452 = dma.done [#allocation10], 8192
        $region84: #{tpu_custom_call.1} parent=63 // pred_fallthru
          _
        // Predicated region
        $region85: #{tpu_custom_call.1} parent=63 // pred_check
          %p453 = pneg %p255
        $region86: #{tpu_custom_call.1} parent=63 // pred_check_branch
          %455 = sbr.rel (%p453) target = $region88
        $region87: #{tpu_custom_call.1} parent=63 // pred_region
          %456 = dma.done [#allocation13], 2048
        $region88: #{tpu_custom_call.1} parent=63 // pred_fallthru
          _
        %s457 = sand.u32 %s53, 1
        %s458 = scalar_lea.sflag [#allocation4], %s457
        %s459 = sand.u32 %s53, 1
        %s460 = smul.addr %s459, 24
        %s461 = scalar_lea.vmem [#allocation3], %s460
        %p462 = pneg %p66
        %p463 = pneg %p63
        %p464 = pneg %p87
        %p465 = pneg %p84
        %p466 = pneg %p108
        %p467 = pneg %p105
        %p468 = pneg %p129
        %p469 = pneg %p126
        %p470 = pneg %p150
        %p471 = pneg %p147
        %p472 = pneg %p171
        %p473 = pneg %p168
        %p474 = pneg %p192
        %p475 = pneg %p189
        %p476 = pneg %p213
        %p477 = pneg %p210
        %p478 = pneg %p234
        %p479 = pneg %p231
        %p480 = pneg %p255
        %p481 = pneg %p252
        %p482 = pneg %p276
        %p483 = pneg %p273
        %p484 = pneg %p302
        %p485 = pneg %p299
        %s486 = sand.u32 %s289, 1
        %s487 = scalar_lea.sflag [#allocation5], %s486
        %s488 = sand.u32 %s289, 1
        %s489 = scalar_lea.vmem [#allocation14], %s488
        %p491 = scmp.eq.s32.totalorder %s36, 0
        // Predicated region
        $region89: #{tpu_custom_call.1} parent=63 // pred_check
          %p492 = pneg %p491
        $region90: #{tpu_custom_call.1} parent=63 // pred_check_branch
          %494 = sbr.rel (%p492) target = $region92
        $region91: #{tpu_custom_call.1} parent=63 // pred_region
          %495 = vst [vmem:[#allocation2] sm:$0xff] 0.0
          %496 = vst [vmem:[#allocation2 + $0x8] sm:$0xff] 0.0
          %497 = vst [vmem:[#allocation2 + $0x10] sm:$0xff] 0.0
          %498 = vst [vmem:[#allocation2 + $0x18] sm:$0xff] 0.0
          %499 = vst [vmem:[#allocation2 + $0x20] sm:$0xff] 0.0
          %500 = vst [vmem:[#allocation2 + $0x28] sm:$0xff] 0.0
        $region92: #{tpu_custom_call.1} parent=63 // pred_fallthru
          _
        %v501 = vld [vmem:[%s432] sm:$0xf]
        %v502 = vld [vmem:[%s432 + $0x4] sm:$0xf]
        %v503 = vld [vmem:[%s432 + $0x8] sm:$0xf]
        %v504 = vld [vmem:[%s432 + $0xc] sm:$0xf]
        %v505 = vld [vmem:[%s432 + $0x10] sm:$0xf]
        %v506 = vld [vmem:[%s432 + $0x14] sm:$0xf]
        %v507 = vunpack.c.l.bf16 %v501
        %v508 = vunpack.c.l.bf16 %v502
        %v509 = vunpack.c.l.bf16 %v503
        %v510 = vunpack.c.l.bf16 %v504
        %v511 = vunpack.c.l.bf16 %v505
        %v512 = vunpack.c.l.bf16 %v506
        %v513 = vld [vmem:[#allocation2] sm:$0xff]
        %v514 = vld [vmem:[#allocation2 + $0x8] sm:$0xff]
        %v515 = vld [vmem:[#allocation2 + $0x10] sm:$0xff]
        %v516 = vld [vmem:[#allocation2 + $0x18] sm:$0xff]
        %v517 = vld [vmem:[#allocation2 + $0x20] sm:$0xff]
        %v518 = vld [vmem:[#allocation2 + $0x28] sm:$0xff]
        %v519 = vadd.f32 %v513, %v507
        %v520 = vadd.f32 %v514, %v508
        %v521 = vadd.f32 %v515, %v509
        %v522 = vadd.f32 %v516, %v510
        %v523 = vadd.f32 %v517, %v511
        %v524 = vadd.f32 %v518, %v512
        %525 = vst [vmem:[#allocation2] sm:$0xff] %v519
        %526 = vst [vmem:[#allocation2 + $0x8] sm:$0xff] %v520
        %527 = vst [vmem:[#allocation2 + $0x10] sm:$0xff] %v521
        %528 = vst [vmem:[#allocation2 + $0x18] sm:$0xff] %v522
        %529 = vst [vmem:[#allocation2 + $0x20] sm:$0xff] %v523
        %530 = vst [vmem:[#allocation2 + $0x28] sm:$0xff] %v524
        // Predicated region
        $region93: #{tpu_custom_call.1} parent=63 // pred_check
          %p531 = pneg %p491
        $region94: #{tpu_custom_call.1} parent=63 // pred_check_branch
          %533 = sbr.rel (%p531) target = $region96
        $region95: #{tpu_custom_call.1} parent=63 // pred_region
          %v534 = vld [vmem:[#allocation2] sm:$0xff]
          %v535 = vld [vmem:[#allocation2 + $0x8] sm:$0xff]
          %v536 = vld [vmem:[#allocation2 + $0x10] sm:$0xff]
          %v537 = vld [vmem:[#allocation2 + $0x18] sm:$0xff]
          %v538 = vld [vmem:[#allocation2 + $0x20] sm:$0xff]
          %v539 = vld [vmem:[#allocation2 + $0x28] sm:$0xff]
          %540 = vadd.xlane.f32.xlu0 %v534
          %v541 = vpop.xlane.xlu0 %540
          %542 = vadd.xlane.f32.xlu0 %v535
          %v543 = vpop.xlane.xlu0 %542
          %544 = vadd.xlane.f32.xlu0 %v536
          %v545 = vpop.xlane.xlu0 %544
          %546 = vadd.xlane.f32.xlu0 %v537
          %v547 = vpop.xlane.xlu0 %546
          %548 = vadd.xlane.f32.xlu0 %v538
          %v549 = vpop.xlane.xlu0 %548
          %550 = vadd.xlane.f32.xlu0 %v539
          %v551 = vpop.xlane.xlu0 %550
          %v552 = vmul.f32 %v541, 0.0625
          %v553 = vmul.f32 %v543, 0.0625
          %v554 = vmul.f32 %v545, 0.0625
          %v555 = vmul.f32 %v547, 0.0625
          %v556 = vmul.f32 %v549, 0.0625
          %v557 = vmul.f32 %v551, 0.0625
          %v558 = vpack.c.bf16 %v553, %v552
          %v559 = vpack.c.bf16 %v555, %v554
          %v560 = vpack.c.bf16 %v557, %v556
          %v561 = vld [vmem:[#allocation6] sm:$0xff]
          %v562 = vld [vmem:[#allocation6 + $0x8] sm:$0xff]
          %v563 = vld [vmem:[#allocation6 + $0x10] sm:$0xff]
          %v564 = vld [vmem:[#allocation6 + $0x18] sm:$0xff]
          %v565 = vld [vmem:[#allocation6 + $0x20] sm:$0xff]
          %v566 = vld [vmem:[#allocation6 + $0x28] sm:$0xff]
          %v567 = vld [vmem:[#allocation6 + $0x30] sm:$0xff]
          %v568 = vld [vmem:[#allocation6 + $0x38] sm:$0xff]
          %v569 = vld [vmem:[#allocation6 + $0x40] sm:$0xff]
          %v570 = vld [vmem:[#allocation6 + $0x48] sm:$0xff]
          %v571 = vld [vmem:[#allocation6 + $0x50] sm:$0xff]
          %v572 = vld [vmem:[#allocation6 + $0x58] sm:$0xff]
          %v573 = vld [vmem:[#allocation6 + $0x60] sm:$0xff]
          %v574 = vld [vmem:[#allocation6 + $0x68] sm:$0xff]
          %v575 = vld [vmem:[#allocation6 + $0x70] sm:$0xff]
          %v576 = vld [vmem:[#allocation6 + $0x78] sm:$0xff]
          %v577 = vld [vmem:[#allocation6 + $0x80] sm:$0xff]
          %v578 = vld [vmem:[#allocation6 + $0x88] sm:$0xff]
          %v579 = vld [vmem:[#allocation8] sm:$0x3f]
          %v583 = vunpack.c.l.b16 %v558
          %v584 = vunpack.c.h.b16 %v558
          %v585 = vunpack.c.l.b16 %v559
          %v586 = vunpack.c.h.b16 %v559
          %v587 = vunpack.c.l.b16 %v560
          %v588 = vunpack.c.h.b16 %v560
          %v589 = vlaneseq
          %v590 = vand.u32 %v589, 127
          %v591 = vlaneseq
          %v592 = vshrl.u32 %v591, 7
          %v593 = vsub.s32 %v590, %v592
          %v594 = vrot.slane %v583, %v593
          %v595 = vadd.s32 %v590, 4294967288
          %v596 = vlaneseq
          %v597 = vshrl.u32 %v596, 7
          %v598 = vsub.s32 %v595, %v597
          %v599 = vrot.slane %v584, %v598
          %vm600 = vcmask 130112
          %v601 = vsel %vm600, %v599, %v594
          %v602 = vadd.s32 %v590, 4294967280
          %v603 = vlaneseq
          %v604 = vshrl.u32 %v603, 7
          %v605 = vsub.s32 %v602, %v604
          %v606 = vrot.slane %v585, %v605
          %vm607 = vcmask 195712
          %v608 = vsel %vm607, %v606, %v601
          %v609 = vadd.s32 %v590, 4294967272
          %v610 = vlaneseq
          %v611 = vshrl.u32 %v610, 7
          %v612 = vsub.s32 %v609, %v611
          %v613 = vrot.slane %v586, %v612
          %vm614 = vcmask 261312
          %v615 = vsel %vm614, %v613, %v608
          %v616 = vadd.s32 %v590, 4294967264
          %v617 = vlaneseq
          %v618 = vshrl.u32 %v617, 7
          %v619 = vsub.s32 %v616, %v618
          %v620 = vrot.slane %v587, %v619
          %vm621 = vcmask 326912
          %v622 = vsel %vm621, %v620, %v615
          %v623 = vadd.s32 %v590, 4294967256
          %v624 = vlaneseq
          %v625 = vshrl.u32 %v624, 7
          %v626 = vsub.s32 %v623, %v625
          %v627 = vrot.slane %v588, %v626
          %vm628 = vcmask 392512
          %v629 = vsel %vm628, %v627, %v622
          %v630 = vpack.c.b16 %v629, %v629
          %v649 = vunpack.c.l.b16 %v561
          %v650 = vunpack.c.h.b16 %v561
          %v651 = vunpack.c.l.b16 %v562
          %v652 = vunpack.c.h.b16 %v562
          %v653 = vunpack.c.l.b16 %v563
          %v654 = vunpack.c.h.b16 %v563
          %v655 = vunpack.c.l.b16 %v564
          %v656 = vunpack.c.h.b16 %v564
          %v657 = vunpack.c.l.b16 %v565
          %v658 = vunpack.c.h.b16 %v565
          %v659 = vunpack.c.l.b16 %v566
          %v660 = vunpack.c.h.b16 %v566
          %v661 = vunpack.c.l.b16 %v567
          %v662 = vunpack.c.h.b16 %v567
          %v663 = vunpack.c.l.b16 %v568
          %v664 = vunpack.c.h.b16 %v568
          %v665 = vunpack.c.l.b16 %v569
          %v666 = vunpack.c.h.b16 %v569
          %v667 = vunpack.c.l.b16 %v570
          %v668 = vunpack.c.h.b16 %v570
          %v669 = vunpack.c.l.b16 %v571
          %v670 = vunpack.c.h.b16 %v571
          %v671 = vunpack.c.l.b16 %v572
          %v672 = vunpack.c.h.b16 %v572
          %v673 = vunpack.c.l.b16 %v573
          %v674 = vunpack.c.h.b16 %v573
          %v675 = vunpack.c.l.b16 %v574
          %v676 = vunpack.c.h.b16 %v574
          %v677 = vunpack.c.l.b16 %v575
          %v678 = vunpack.c.h.b16 %v575
          %v679 = vunpack.c.l.b16 %v576
          %v680 = vunpack.c.h.b16 %v576
          %v681 = vunpack.c.l.b16 %v577
          %v682 = vunpack.c.h.b16 %v577
          %v683 = vunpack.c.l.b16 %v578
          %v684 = vunpack.c.h.b16 %v578
          %v685 = vpack.c.b16 %v655, %v649
          %v686 = vpack.c.b16 %v656, %v650
          %v687 = vpack.c.b16 %v657, %v651
          %v688 = vpack.c.b16 %v658, %v652
          %v689 = vpack.c.b16 %v659, %v653
          %v690 = vpack.c.b16 %v660, %v654
          %v691 = vpack.c.b16 %v667, %v661
          %v692 = vpack.c.b16 %v668, %v662
          %v693 = vpack.c.b16 %v669, %v663
          %v694 = vpack.c.b16 %v670, %v664
          %v695 = vpack.c.b16 %v671, %v665
          %v696 = vpack.c.b16 %v672, %v666
          %v697 = vpack.c.b16 %v679, %v673
          %v698 = vpack.c.b16 %v680, %v674
          %v699 = vpack.c.b16 %v681, %v675
          %v700 = vpack.c.b16 %v682, %v676
          %v701 = vpack.c.b16 %v683, %v677
          %v702 = vpack.c.b16 %v684, %v678
          %v722 = vlaneseq
          %v723 = vshrl.u32 %v722, 7
          %v724 = vsub.s32 0, %v723
          %v725 = vrot.slane %v579, %v724
          %v726 = vlaneseq
          %v727 = vshrl.u32 %v726, 7
          %v728 = vsub.s32 1, %v727
          %v729 = vrot.slane %v579, %v728
          %v730 = vlaneseq
          %v731 = vshrl.u32 %v730, 7
          %v732 = vsub.s32 2, %v731
          %v733 = vrot.slane %v579, %v732
          %v734 = vlaneseq
          %v735 = vshrl.u32 %v734, 7
          %v736 = vsub.s32 3, %v735
          %v737 = vrot.slane %v579, %v736
          %v738 = vlaneseq
          %v739 = vshrl.u32 %v738, 7
          %v740 = vsub.s32 4, %v739
          %v741 = vrot.slane %v579, %v740
          %v742 = vlaneseq
          %v743 = vshrl.u32 %v742, 7
          %v744 = vsub.s32 5, %v743
          %v745 = vrot.slane %v579, %v744
          %vm752 = vcmask 392192
          %v754 = vsel %vm752, %v630, 0
          %756 = vmatprep.subr.bf16.mxu0 0
          %757 = vmatpush1.bf16.msra.mxu0 0
          %758 = vmatprep.subr.bf16.mxu0 0
          %759 = vmatpush1.bf16.msra.mxu0 0
          %760 = vmatprep.subr.bf16.mxu0 0
          %761 = vmatpush1.bf16.msra.mxu0 0
          %762 = vmatprep.subr.bf16.mxu0 0
          %763 = vmatpush1.bf16.msra.mxu0 0
          %764 = vmatprep.subr.bf16.mxu0 0
          %765 = vmatpush1.bf16.msra.mxu0 0
          %766 = vmatprep.subr.bf16.mxu0 %v698
          %767 = vmatpush1.bf16.msra.mxu0 %v697
          %768 = vmatprep.subr.bf16.mxu0 %v692
          %769 = vmatpush1.bf16.msra.mxu0 %v691
          %770 = vmatprep.subr.bf16.mxu0 %v686
          %771 = vmatpush1.bf16.msra.mxu0 %v685
          %772 = vmatprep.subr.bf16.mxu0 0
          %773 = vmatpush2.bf16.msra.mxu0 0
          %774 = vmatprep.subr.bf16.mxu0 0
          %775 = vmatpush2.bf16.msra.mxu0 0
          %776 = vmatprep.subr.bf16.mxu0 0
          %777 = vmatpush2.bf16.msra.mxu0 0
          %778 = vmatprep.subr.bf16.mxu0 0
          %779 = vmatpush2.bf16.msra.mxu0 0
          %780 = vmatprep.subr.bf16.mxu0 0
          %781 = vmatpush2.bf16.msra.mxu0 0
          %782 = vmatprep.subr.bf16.mxu0 0
          %783 = vmatpush2.bf16.msra.mxu0 0
          %784 = vmatprep.subr.bf16.mxu0 0
          %785 = vmatpush2.bf16.msra.mxu0 0
          %786 = vmatprep.subr.bf16.mxu0 0
          %787 = vmatpush2.bf16.msra.mxu0 0
          %788 = vmatprep.mubr.bf16.mxu0 0
          %789 = vmatmul.mubr.bf16.gmra.mxu0 %v754
          %v790 = vpop.f32.mrf.mxu0
          %v791 = vadd.f32 %v725, %v790
          %v792 = vpop.f32.mrf.mxu0
          %v793 = vadd.f32 %v729, %v792
          %v794 = vpop.f32.mrf.mxu0
          %v795 = vpop.f32.mrf.mxu0
          %796 = vdwg.mxu0
          %797 = vmatprep.subr.bf16.mxu0 0
          %798 = vmatpush1.bf16.msra.mxu0 0
          %799 = vmatprep.subr.bf16.mxu0 0
          %800 = vmatpush1.bf16.msra.mxu0 0
          %801 = vmatprep.subr.bf16.mxu0 0
          %802 = vmatpush1.bf16.msra.mxu0 0
          %803 = vmatprep.subr.bf16.mxu0 0
          %804 = vmatpush1.bf16.msra.mxu0 0
          %805 = vmatprep.subr.bf16.mxu0 0
          %806 = vmatpush1.bf16.msra.mxu0 0
          %807 = vmatprep.subr.bf16.mxu0 %v700
          %808 = vmatpush1.bf16.msra.mxu0 %v699
          %809 = vmatprep.subr.bf16.mxu0 %v694
          %810 = vmatpush1.bf16.msra.mxu0 %v693
          %811 = vmatprep.subr.bf16.mxu0 %v688
          %812 = vmatpush1.bf16.msra.mxu0 %v687
          %813 = vmatprep.subr.bf16.mxu0 0
          %814 = vmatpush2.bf16.msra.mxu0 0
          %815 = vmatprep.subr.bf16.mxu0 0
          %816 = vmatpush2.bf16.msra.mxu0 0
          %817 = vmatprep.subr.bf16.mxu0 0
          %818 = vmatpush2.bf16.msra.mxu0 0
          %819 = vmatprep.subr.bf16.mxu0 0
          %820 = vmatpush2.bf16.msra.mxu0 0
          %821 = vmatprep.subr.bf16.mxu0 0
          %822 = vmatpush2.bf16.msra.mxu0 0
          %823 = vmatprep.subr.bf16.mxu0 0
          %824 = vmatpush2.bf16.msra.mxu0 0
          %825 = vmatprep.subr.bf16.mxu0 0
          %826 = vmatpush2.bf16.msra.mxu0 0
          %827 = vmatprep.subr.bf16.mxu0 0
          %828 = vmatpush2.bf16.msra.mxu0 0
          %829 = vmatprep.mubr.bf16.mxu0 0
          %830 = vmatmul.mubr.bf16.gmra.mxu0 %v754
          %v831 = vpop.f32.mrf.mxu0
          %v832 = vadd.f32 %v733, %v831
          %v833 = vpop.f32.mrf.mxu0
          %v834 = vadd.f32 %v737, %v833
          %v835 = vpop.f32.mrf.mxu0
          %v836 = vpop.f32.mrf.mxu0
          %837 = vdwg.mxu0
          %838 = vmatprep.subr.bf16.mxu0 0
          %839 = vmatpush1.bf16.msra.mxu0 0
          %840 = vmatprep.subr.bf16.mxu0 0
          %841 = vmatpush1.bf16.msra.mxu0 0
          %842 = vmatprep.subr.bf16.mxu0 0
          %843 = vmatpush1.bf16.msra.mxu0 0
          %844 = vmatprep.subr.bf16.mxu0 0
          %845 = vmatpush1.bf16.msra.mxu0 0
          %846 = vmatprep.subr.bf16.mxu0 0
          %847 = vmatpush1.bf16.msra.mxu0 0
          %848 = vmatprep.subr.bf16.mxu0 %v702
          %849 = vmatpush1.bf16.msra.mxu0 %v701
          %850 = vmatprep.subr.bf16.mxu0 %v696
          %851 = vmatpush1.bf16.msra.mxu0 %v695
          %852 = vmatprep.subr.bf16.mxu0 %v690
          %853 = vmatpush1.bf16.msra.mxu0 %v689
          %854 = vmatprep.subr.bf16.mxu0 0
          %855 = vmatpush2.bf16.msra.mxu0 0
          %856 = vmatprep.subr.bf16.mxu0 0
          %857 = vmatpush2.bf16.msra.mxu0 0
          %858 = vmatprep.subr.bf16.mxu0 0
          %859 = vmatpush2.bf16.msra.mxu0 0
          %860 = vmatprep.subr.bf16.mxu0 0
          %861 = vmatpush2.bf16.msra.mxu0 0
          %862 = vmatprep.subr.bf16.mxu0 0
          %863 = vmatpush2.bf16.msra.mxu0 0
          %864 = vmatprep.subr.bf16.mxu0 0
          %865 = vmatpush2.bf16.msra.mxu0 0
          %866 = vmatprep.subr.bf16.mxu0 0
          %867 = vmatpush2.bf16.msra.mxu0 0
          %868 = vmatprep.subr.bf16.mxu0 0
          %869 = vmatpush2.bf16.msra.mxu0 0
          %870 = vmatprep.mubr.bf16.mxu0 0
          %871 = vmatmul.mubr.bf16.gmra.mxu0 %v754
          %v872 = vpop.f32.mrf.mxu0
          %v873 = vadd.f32 %v741, %v872
          %v874 = vpop.f32.mrf.mxu0
          %v875 = vadd.f32 %v745, %v874
          %v876 = vpop.f32.mrf.mxu0
          %v877 = vpop.f32.mrf.mxu0
          %878 = vdwg.mxu0
          %v879 = vpack.c.bf16 %v791, %v791
          %v880 = vpack.c.bf16 %v793, %v793
          %v881 = vpack.c.bf16 %v832, %v832
          %v882 = vpack.c.bf16 %v834, %v834
          %v883 = vpack.c.bf16 %v873, %v873
          %v884 = vpack.c.bf16 %v875, %v875
          %v885 = vld [vmem:[#allocation9] sm:$0xff]
          %v886 = vld [vmem:[#allocation9 + $0x8] sm:$0xff]
          %v887 = vld [vmem:[#allocation9 + $0x10] sm:$0xff]
          %v888 = vld [vmem:[#allocation9 + $0x18] sm:$0xff]
          %v889 = vld [vmem:[#allocation9 + $0x20] sm:$0xff]
          %v890 = vld [vmem:[#allocation9 + $0x28] sm:$0xff]
          %v891 = vld [vmem:[#allocation9 + $0x30] sm:$0xff]
          %v892 = vld [vmem:[#allocation9 + $0x38] sm:$0xff]
          %v893 = vld [vmem:[#allocation9 + $0x40] sm:$0xff]
          %v894 = vld [vmem:[#allocation9 + $0x48] sm:$0xff]
          %v895 = vld [vmem:[#allocation9 + $0x50] sm:$0xff]
          %v896 = vld [vmem:[#allocation9 + $0x58] sm:$0xff]
          %v897 = vld [vmem:[#allocation9 + $0x60] sm:$0xff]
          %v898 = vld [vmem:[#allocation9 + $0x68] sm:$0xff]
          %v899 = vld [vmem:[#allocation9 + $0x70] sm:$0xff]
          %v900 = vld [vmem:[#allocation9 + $0x78] sm:$0xff]
          %v901 = vld [vmem:[#allocation9 + $0x80] sm:$0xff]
          %v902 = vld [vmem:[#allocation9 + $0x88] sm:$0xff]
          %v903 = vld [vmem:[#allocation9 + $0x90] sm:$0xff]
          %v904 = vld [vmem:[#allocation9 + $0x98] sm:$0xff]
          %v905 = vld [vmem:[#allocation9 + $0xa0] sm:$0xff]
          %v906 = vld [vmem:[#allocation9 + $0xa8] sm:$0xff]
          %v907 = vld [vmem:[#allocation9 + $0xb0] sm:$0xff]
          %v908 = vld [vmem:[#allocation9 + $0xb8] sm:$0xff]
          %v909 = vld [vmem:[#allocation9 + $0xc0] sm:$0xff]
          %v910 = vld [vmem:[#allocation9 + $0xc8] sm:$0xff]
          %v911 = vld [vmem:[#allocation9 + $0xd0] sm:$0xff]
          %v912 = vld [vmem:[#allocation9 + $0xd8] sm:$0xff]
          %v913 = vld [vmem:[#allocation9 + $0xe0] sm:$0xff]
          %v914 = vld [vmem:[#allocation9 + $0xe8] sm:$0xff]
          %v915 = vld [vmem:[#allocation9 + $0xf0] sm:$0xff]
          %v916 = vld [vmem:[#allocation9 + $0xf8] sm:$0xff]
          %v917 = vld [vmem:[#allocation9 + $0x100] sm:$0xff]
          %v918 = vld [vmem:[#allocation9 + $0x108] sm:$0xff]
          %v919 = vld [vmem:[#allocation9 + $0x110] sm:$0xff]
          %v920 = vld [vmem:[#allocation9 + $0x118] sm:$0xff]
          %v921 = vld [vmem:[#allocation9 + $0x120] sm:$0xff]
          %v922 = vld [vmem:[#allocation9 + $0x128] sm:$0xff]
          %v923 = vld [vmem:[#allocation9 + $0x130] sm:$0xff]
          %v924 = vld [vmem:[#allocation9 + $0x138] sm:$0xff]
          %v925 = vld [vmem:[#allocation9 + $0x140] sm:$0xff]
          %v926 = vld [vmem:[#allocation9 + $0x148] sm:$0xff]
          %v927 = vld [vmem:[#allocation9 + $0x150] sm:$0xff]
          %v928 = vld [vmem:[#allocation9 + $0x158] sm:$0xff]
          %v929 = vld [vmem:[#allocation9 + $0x160] sm:$0xff]
          %v930 = vld [vmem:[#allocation9 + $0x168] sm:$0xff]
          %v931 = vld [vmem:[#allocation9 + $0x170] sm:$0xff]
          %v932 = vld [vmem:[#allocation9 + $0x178] sm:$0xff]
          %v933 = vld [vmem:[#allocation9 + $0x180] sm:$0xff]
          %v934 = vld [vmem:[#allocation9 + $0x188] sm:$0xff]
          %v935 = vld [vmem:[#allocation9 + $0x190] sm:$0xff]
          %v936 = vld [vmem:[#allocation9 + $0x198] sm:$0xff]
          %v937 = vld [vmem:[#allocation9 + $0x1a0] sm:$0xff]
          %v938 = vld [vmem:[#allocation9 + $0x1a8] sm:$0xff]
          %v939 = vld [vmem:[#allocation9 + $0x1b0] sm:$0xff]
          %v940 = vld [vmem:[#allocation9 + $0x1b8] sm:$0xff]
          %v941 = vld [vmem:[#allocation9 + $0x1c0] sm:$0xff]
          %v942 = vld [vmem:[#allocation9 + $0x1c8] sm:$0xff]
          %v943 = vld [vmem:[#allocation9 + $0x1d0] sm:$0xff]
          %v944 = vld [vmem:[#allocation9 + $0x1d8] sm:$0xff]
          %v945 = vld [vmem:[#allocation9 + $0x1e0] sm:$0xff]
          %v946 = vld [vmem:[#allocation9 + $0x1e8] sm:$0xff]
          %v947 = vld [vmem:[#allocation9 + $0x1f0] sm:$0xff]
          %v948 = vld [vmem:[#allocation9 + $0x1f8] sm:$0xff]
          %v949 = vld [vmem:[#allocation9 + $0x200] sm:$0xff]
          %v950 = vld [vmem:[#allocation9 + $0x208] sm:$0xff]
          %v951 = vld [vmem:[#allocation9 + $0x210] sm:$0xff]
          %v952 = vld [vmem:[#allocation9 + $0x218] sm:$0xff]
          %v953 = vld [vmem:[#allocation9 + $0x220] sm:$0xff]
          %v954 = vld [vmem:[#allocation9 + $0x228] sm:$0xff]
          %v955 = vld [vmem:[#allocation9 + $0x230] sm:$0xff]
          %v956 = vld [vmem:[#allocation9 + $0x238] sm:$0xff]
          %v957 = vld [vmem:[#allocation9 + $0x240] sm:$0xff]
          %v958 = vld [vmem:[#allocation9 + $0x248] sm:$0xff]
          %v959 = vld [vmem:[#allocation9 + $0x250] sm:$0xff]
          %v960 = vld [vmem:[#allocation9 + $0x258] sm:$0xff]
          %v961 = vld [vmem:[#allocation9 + $0x260] sm:$0xff]
          %v962 = vld [vmem:[#allocation9 + $0x268] sm:$0xff]
          %v963 = vld [vmem:[#allocation9 + $0x270] sm:$0xff]
          %v964 = vld [vmem:[#allocation9 + $0x278] sm:$0xff]
          %v965 = vld [vmem:[#allocation9 + $0x280] sm:$0xff]
          %v966 = vld [vmem:[#allocation9 + $0x288] sm:$0xff]
          %v967 = vld [vmem:[#allocation9 + $0x290] sm:$0xff]
          %v968 = vld [vmem:[#allocation9 + $0x298] sm:$0xff]
          %v969 = vld [vmem:[#allocation9 + $0x2a0] sm:$0xff]
          %v970 = vld [vmem:[#allocation9 + $0x2a8] sm:$0xff]
          %v971 = vld [vmem:[#allocation9 + $0x2b0] sm:$0xff]
          %v972 = vld [vmem:[#allocation9 + $0x2b8] sm:$0xff]
          %v973 = vld [vmem:[#allocation9 + $0x2c0] sm:$0xff]
          %v974 = vld [vmem:[#allocation9 + $0x2c8] sm:$0xff]
          %v975 = vld [vmem:[#allocation9 + $0x2d0] sm:$0xff]
          %v976 = vld [vmem:[#allocation9 + $0x2d8] sm:$0xff]
          %v977 = vld [vmem:[#allocation9 + $0x2e0] sm:$0xff]
          %v978 = vld [vmem:[#allocation9 + $0x2e8] sm:$0xff]
          %v979 = vld [vmem:[#allocation9 + $0x2f0] sm:$0xff]
          %v980 = vld [vmem:[#allocation9 + $0x2f8] sm:$0xff]
          %v981 = vld [vmem:[#allocation9 + $0x300] sm:$0xff]
          %v982 = vld [vmem:[#allocation9 + $0x308] sm:$0xff]
          %v983 = vld [vmem:[#allocation9 + $0x310] sm:$0xff]
          %v984 = vld [vmem:[#allocation9 + $0x318] sm:$0xff]
          %v985 = vld [vmem:[#allocation9 + $0x320] sm:$0xff]
          %v986 = vld [vmem:[#allocation9 + $0x328] sm:$0xff]
          %v987 = vld [vmem:[#allocation9 + $0x330] sm:$0xff]
          %v988 = vld [vmem:[#allocation9 + $0x338] sm:$0xff]
          %v989 = vld [vmem:[#allocation9 + $0x340] sm:$0xff]
          %v990 = vld [vmem:[#allocation9 + $0x348] sm:$0xff]
          %v991 = vld [vmem:[#allocation9 + $0x350] sm:$0xff]
          %v992 = vld [vmem:[#allocation9 + $0x358] sm:$0xff]
          %v993 = vld [vmem:[#allocation9 + $0x360] sm:$0xff]
          %v994 = vld [vmem:[#allocation9 + $0x368] sm:$0xff]
          %v995 = vld [vmem:[#allocation9 + $0x370] sm:$0xff]
          %v996 = vld [vmem:[#allocation9 + $0x378] sm:$0xff]
          %v997 = vld [vmem:[#allocation9 + $0x380] sm:$0xff]
          %v998 = vld [vmem:[#allocation9 + $0x388] sm:$0xff]
          %v999 = vld [vmem:[#allocation9 + $0x390] sm:$0xff]
          %v1000 = vld [vmem:[#allocation9 + $0x398] sm:$0xff]
          %v1001 = vld [vmem:[#allocation9 + $0x3a0] sm:$0xff]
          %v1002 = vld [vmem:[#allocation9 + $0x3a8] sm:$0xff]
          %v1003 = vld [vmem:[#allocation9 + $0x3b0] sm:$0xff]
          %v1004 = vld [vmem:[#allocation9 + $0x3b8] sm:$0xff]
          %v1005 = vld [vmem:[#allocation9 + $0x3c0] sm:$0xff]
          %v1006 = vld [vmem:[#allocation9 + $0x3c8] sm:$0xff]
          %v1007 = vld [vmem:[#allocation9 + $0x3d0] sm:$0xff]
          %v1008 = vld [vmem:[#allocation9 + $0x3d8] sm:$0xff]
          %v1009 = vld [vmem:[#allocation9 + $0x3e0] sm:$0xff]
          %v1010 = vld [vmem:[#allocation9 + $0x3e8] sm:$0xff]
          %v1011 = vld [vmem:[#allocation9 + $0x3f0] sm:$0xff]
          %v1012 = vld [vmem:[#allocation9 + $0x3f8] sm:$0xff]
          %v1013 = vld [vmem:[#allocation9 + $0x400] sm:$0xff]
          %v1014 = vld [vmem:[#allocation9 + $0x408] sm:$0xff]
          %v1015 = vld [vmem:[#allocation9 + $0x410] sm:$0xff]
          %v1016 = vld [vmem:[#allocation9 + $0x418] sm:$0xff]
          %v1017 = vld [vmem:[#allocation9 + $0x420] sm:$0xff]
          %v1018 = vld [vmem:[#allocation9 + $0x428] sm:$0xff]
          %v1019 = vld [vmem:[#allocation9 + $0x430] sm:$0xff]
          %v1020 = vld [vmem:[#allocation9 + $0x438] sm:$0xff]
          %v1021 = vld [vmem:[#allocation9 + $0x440] sm:$0xff]
          %v1022 = vld [vmem:[#allocation9 + $0x448] sm:$0xff]
          %v1023 = vld [vmem:[#allocation9 + $0x450] sm:$0xff]
          %v1024 = vld [vmem:[#allocation9 + $0x458] sm:$0xff]
          %v1025 = vld [vmem:[#allocation9 + $0x460] sm:$0xff]
          %v1026 = vld [vmem:[#allocation9 + $0x468] sm:$0xff]
          %v1027 = vld [vmem:[#allocation9 + $0x470] sm:$0xff]
          %v1028 = vld [vmem:[#allocation9 + $0x478] sm:$0xff]
          %v1029 = vld [vmem:[#allocation9 + $0x480] sm:$0xff]
          %v1030 = vld [vmem:[#allocation9 + $0x488] sm:$0xff]
          %v1031 = vld [vmem:[#allocation9 + $0x490] sm:$0xff]
          %v1032 = vld [vmem:[#allocation9 + $0x498] sm:$0xff]
          %v1033 = vld [vmem:[#allocation9 + $0x4a0] sm:$0xff]
          %v1034 = vld [vmem:[#allocation9 + $0x4a8] sm:$0xff]
          %v1035 = vld [vmem:[#allocation9 + $0x4b0] sm:$0xff]
          %v1036 = vld [vmem:[#allocation9 + $0x4b8] sm:$0xff]
          %v1037 = vld [vmem:[#allocation9 + $0x4c0] sm:$0xff]
          %v1038 = vld [vmem:[#allocation9 + $0x4c8] sm:$0xff]
          %v1039 = vld [vmem:[#allocation9 + $0x4d0] sm:$0xff]
          %v1040 = vld [vmem:[#allocation9 + $0x4d8] sm:$0xff]
          %v1041 = vld [vmem:[#allocation9 + $0x4e0] sm:$0xff]
          %v1042 = vld [vmem:[#allocation9 + $0x4e8] sm:$0xff]
          %v1043 = vld [vmem:[#allocation9 + $0x4f0] sm:$0xff]
          %v1044 = vld [vmem:[#allocation9 + $0x4f8] sm:$0xff]
          %v1045 = vld [vmem:[#allocation9 + $0x500] sm:$0xff]
          %v1046 = vld [vmem:[#allocation9 + $0x508] sm:$0xff]
          %v1047 = vld [vmem:[#allocation9 + $0x510] sm:$0xff]
          %v1048 = vld [vmem:[#allocation9 + $0x518] sm:$0xff]
          %v1049 = vld [vmem:[#allocation9 + $0x520] sm:$0xff]
          %v1050 = vld [vmem:[#allocation9 + $0x528] sm:$0xff]
          %v1051 = vld [vmem:[#allocation9 + $0x530] sm:$0xff]
          %v1052 = vld [vmem:[#allocation9 + $0x538] sm:$0xff]
          %v1053 = vld [vmem:[#allocation9 + $0x540] sm:$0xff]
          %v1054 = vld [vmem:[#allocation9 + $0x548] sm:$0xff]
          %v1055 = vld [vmem:[#allocation9 + $0x550] sm:$0xff]
          %v1056 = vld [vmem:[#allocation9 + $0x558] sm:$0xff]
          %v1057 = vld [vmem:[#allocation9 + $0x560] sm:$0xff]
          %v1058 = vld [vmem:[#allocation9 + $0x568] sm:$0xff]
          %v1059 = vld [vmem:[#allocation9 + $0x570] sm:$0xff]
          %v1060 = vld [vmem:[#allocation9 + $0x578] sm:$0xff]
          %v1061 = vld [vmem:[#allocation9 + $0x580] sm:$0xff]
          %v1062 = vld [vmem:[#allocation9 + $0x588] sm:$0xff]
          %v1063 = vld [vmem:[#allocation9 + $0x590] sm:$0xff]
          %v1064 = vld [vmem:[#allocation9 + $0x598] sm:$0xff]
          %v1065 = vld [vmem:[#allocation9 + $0x5a0] sm:$0xff]
          %v1066 = vld [vmem:[#allocation9 + $0x5a8] sm:$0xff]
          %v1067 = vld [vmem:[#allocation9 + $0x5b0] sm:$0xff]
          %v1068 = vld [vmem:[#allocation9 + $0x5b8] sm:$0xff]
          %v1069 = vld [vmem:[#allocation9 + $0x5c0] sm:$0xff]
          %v1070 = vld [vmem:[#allocation9 + $0x5c8] sm:$0xff]
          %v1071 = vld [vmem:[#allocation9 + $0x5d0] sm:$0xff]
          %v1072 = vld [vmem:[#allocation9 + $0x5d8] sm:$0xff]
          %v1073 = vld [vmem:[#allocation9 + $0x5e0] sm:$0xff]
          %v1074 = vld [vmem:[#allocation9 + $0x5e8] sm:$0xff]
          %v1075 = vld [vmem:[#allocation9 + $0x5f0] sm:$0xff]
          %v1076 = vld [vmem:[#allocation9 + $0x5f8] sm:$0xff]
          %v1077 = vld [vmem:[%s4] sm:$0xf]
          %v1270 = vunpack.c.l.b16 %v885
          %v1271 = vunpack.c.h.b16 %v885
          %v1272 = vunpack.c.l.b16 %v886
          %v1273 = vunpack.c.h.b16 %v886
          %v1274 = vunpack.c.l.b16 %v887
          %v1275 = vunpack.c.h.b16 %v887
          %v1276 = vunpack.c.l.b16 %v888
          %v1277 = vunpack.c.h.b16 %v888
          %v1278 = vunpack.c.l.b16 %v889
          %v1279 = vunpack.c.h.b16 %v889
          %v1280 = vunpack.c.l.b16 %v890
          %v1281 = vunpack.c.h.b16 %v890
          %v1282 = vunpack.c.l.b16 %v891
          %v1283 = vunpack.c.h.b16 %v891
          %v1284 = vunpack.c.l.b16 %v892
          %v1285 = vunpack.c.h.b16 %v892
          %v1286 = vunpack.c.l.b16 %v893
          %v1287 = vunpack.c.h.b16 %v893
          %v1288 = vunpack.c.l.b16 %v894
          %v1289 = vunpack.c.h.b16 %v894
          %v1290 = vunpack.c.l.b16 %v895
          %v1291 = vunpack.c.h.b16 %v895
          %v1292 = vunpack.c.l.b16 %v896
          %v1293 = vunpack.c.h.b16 %v896
          %v1294 = vunpack.c.l.b16 %v897
          %v1295 = vunpack.c.h.b16 %v897
          %v1296 = vunpack.c.l.b16 %v898
          %v1297 = vunpack.c.h.b16 %v898
          %v1298 = vunpack.c.l.b16 %v899
          %v1299 = vunpack.c.h.b16 %v899
          %v1300 = vunpack.c.l.b16 %v900
          %v1301 = vunpack.c.h.b16 %v900
          %v1302 = vunpack.c.l.b16 %v901
          %v1303 = vunpack.c.h.b16 %v901
          %v1304 = vunpack.c.l.b16 %v902
          %v1305 = vunpack.c.h.b16 %v902
          %v1306 = vunpack.c.l.b16 %v903
          %v1307 = vunpack.c.h.b16 %v903
          %v1308 = vunpack.c.l.b16 %v904
          %v1309 = vunpack.c.h.b16 %v904
          %v1310 = vunpack.c.l.b16 %v905
          %v1311 = vunpack.c.h.b16 %v905
          %v1312 = vunpack.c.l.b16 %v906
          %v1313 = vunpack.c.h.b16 %v906
          %v1314 = vunpack.c.l.b16 %v907
          %v1315 = vunpack.c.h.b16 %v907
          %v1316 = vunpack.c.l.b16 %v908
          %v1317 = vunpack.c.h.b16 %v908
          %v1318 = vunpack.c.l.b16 %v909
          %v1319 = vunpack.c.h.b16 %v909
          %v1320 = vunpack.c.l.b16 %v910
          %v1321 = vunpack.c.h.b16 %v910
          %v1322 = vunpack.c.l.b16 %v911
          %v1323 = vunpack.c.h.b16 %v911
          %v1324 = vunpack.c.l.b16 %v912
          %v1325 = vunpack.c.h.b16 %v912
          %v1326 = vunpack.c.l.b16 %v913
          %v1327 = vunpack.c.h.b16 %v913
          %v1328 = vunpack.c.l.b16 %v914
          %v1329 = vunpack.c.h.b16 %v914
          %v1330 = vunpack.c.l.b16 %v915
          %v1331 = vunpack.c.h.b16 %v915
          %v1332 = vunpack.c.l.b16 %v916
          %v1333 = vunpack.c.h.b16 %v916
          %v1334 = vunpack.c.l.b16 %v917
          %v1335 = vunpack.c.h.b16 %v917
          %v1336 = vunpack.c.l.b16 %v918
          %v1337 = vunpack.c.h.b16 %v918
          %v1338 = vunpack.c.l.b16 %v919
          %v1339 = vunpack.c.h.b16 %v919
          %v1340 = vunpack.c.l.b16 %v920
          %v1341 = vunpack.c.h.b16 %v920
          %v1342 = vunpack.c.l.b16 %v921
          %v1343 = vunpack.c.h.b16 %v921
          %v1344 = vunpack.c.l.b16 %v922
          %v1345 = vunpack.c.h.b16 %v922
          %v1346 = vunpack.c.l.b16 %v923
          %v1347 = vunpack.c.h.b16 %v923
          %v1348 = vunpack.c.l.b16 %v924
          %v1349 = vunpack.c.h.b16 %v924
          %v1350 = vunpack.c.l.b16 %v925
          %v1351 = vunpack.c.h.b16 %v925
          %v1352 = vunpack.c.l.b16 %v926
          %v1353 = vunpack.c.h.b16 %v926
          %v1354 = vunpack.c.l.b16 %v927
          %v1355 = vunpack.c.h.b16 %v927
          %v1356 = vunpack.c.l.b16 %v928
          %v1357 = vunpack.c.h.b16 %v928
          %v1358 = vunpack.c.l.b16 %v929
          %v1359 = vunpack.c.h.b16 %v929
          %v1360 = vunpack.c.l.b16 %v930
          %v1361 = vunpack.c.h.b16 %v930
          %v1362 = vunpack.c.l.b16 %v931
          %v1363 = vunpack.c.h.b16 %v931
          %v1364 = vunpack.c.l.b16 %v932
          %v1365 = vunpack.c.h.b16 %v932
          %v1366 = vunpack.c.l.b16 %v933
          %v1367 = vunpack.c.h.b16 %v933
          %v1368 = vunpack.c.l.b16 %v934
          %v1369 = vunpack.c.h.b16 %v934
          %v1370 = vunpack.c.l.b16 %v935
          %v1371 = vunpack.c.h.b16 %v935
          %v1372 = vunpack.c.l.b16 %v936
          %v1373 = vunpack.c.h.b16 %v936
          %v1374 = vunpack.c.l.b16 %v937
          %v1375 = vunpack.c.h.b16 %v937
          %v1376 = vunpack.c.l.b16 %v938
          %v1377 = vunpack.c.h.b16 %v938
          %v1378 = vunpack.c.l.b16 %v939
          %v1379 = vunpack.c.h.b16 %v939
          %v1380 = vunpack.c.l.b16 %v940
          %v1381 = vunpack.c.h.b16 %v940
          %v1382 = vunpack.c.l.b16 %v941
          %v1383 = vunpack.c.h.b16 %v941
          %v1384 = vunpack.c.l.b16 %v942
          %v1385 = vunpack.c.h.b16 %v942
          %v1386 = vunpack.c.l.b16 %v943
          %v1387 = vunpack.c.h.b16 %v943
          %v1388 = vunpack.c.l.b16 %v944
          %v1389 = vunpack.c.h.b16 %v944
          %v1390 = vunpack.c.l.b16 %v945
          %v1391 = vunpack.c.h.b16 %v945
          %v1392 = vunpack.c.l.b16 %v946
          %v1393 = vunpack.c.h.b16 %v946
          %v1394 = vunpack.c.l.b16 %v947
          %v1395 = vunpack.c.h.b16 %v947
          %v1396 = vunpack.c.l.b16 %v948
          %v1397 = vunpack.c.h.b16 %v948
          %v1398 = vunpack.c.l.b16 %v949
          %v1399 = vunpack.c.h.b16 %v949
          %v1400 = vunpack.c.l.b16 %v950
          %v1401 = vunpack.c.h.b16 %v950
          %v1402 = vunpack.c.l.b16 %v951
          %v1403 = vunpack.c.h.b16 %v951
          %v1404 = vunpack.c.l.b16 %v952
          %v1405 = vunpack.c.h.b16 %v952
          %v1406 = vunpack.c.l.b16 %v953
          %v1407 = vunpack.c.h.b16 %v953
          %v1408 = vunpack.c.l.b16 %v954
          %v1409 = vunpack.c.h.b16 %v954
          %v1410 = vunpack.c.l.b16 %v955
          %v1411 = vunpack.c.h.b16 %v955
          %v1412 = vunpack.c.l.b16 %v956
          %v1413 = vunpack.c.h.b16 %v956
          %v1414 = vunpack.c.l.b16 %v957
          %v1415 = vunpack.c.h.b16 %v957
          %v1416 = vunpack.c.l.b16 %v958
          %v1417 = vunpack.c.h.b16 %v958
          %v1418 = vunpack.c.l.b16 %v959
          %v1419 = vunpack.c.h.b16 %v959
          %v1420 = vunpack.c.l.b16 %v960
          %v1421 = vunpack.c.h.b16 %v960
          %v1422 = vunpack.c.l.b16 %v961
          %v1423 = vunpack.c.h.b16 %v961
          %v1424 = vunpack.c.l.b16 %v962
          %v1425 = vunpack.c.h.b16 %v962
          %v1426 = vunpack.c.l.b16 %v963
          %v1427 = vunpack.c.h.b16 %v963
          %v1428 = vunpack.c.l.b16 %v964
          %v1429 = vunpack.c.h.b16 %v964
          %v1430 = vunpack.c.l.b16 %v965
          %v1431 = vunpack.c.h.b16 %v965
          %v1432 = vunpack.c.l.b16 %v966
          %v1433 = vunpack.c.h.b16 %v966
          %v1434 = vunpack.c.l.b16 %v967
          %v1435 = vunpack.c.h.b16 %v967
          %v1436 = vunpack.c.l.b16 %v968
          %v1437 = vunpack.c.h.b16 %v968
          %v1438 = vunpack.c.l.b16 %v969
          %v1439 = vunpack.c.h.b16 %v969
          %v1440 = vunpack.c.l.b16 %v970
          %v1441 = vunpack.c.h.b16 %v970
          %v1442 = vunpack.c.l.b16 %v971
          %v1443 = vunpack.c.h.b16 %v971
          %v1444 = vunpack.c.l.b16 %v972
          %v1445 = vunpack.c.h.b16 %v972
          %v1446 = vunpack.c.l.b16 %v973
          %v1447 = vunpack.c.h.b16 %v973
          %v1448 = vunpack.c.l.b16 %v974
          %v1449 = vunpack.c.h.b16 %v974
          %v1450 = vunpack.c.l.b16 %v975
          %v1451 = vunpack.c.h.b16 %v975
          %v1452 = vunpack.c.l.b16 %v976
          %v1453 = vunpack.c.h.b16 %v976
          %v1454 = vunpack.c.l.b16 %v977
          %v1455 = vunpack.c.h.b16 %v977
          %v1456 = vunpack.c.l.b16 %v978
          %v1457 = vunpack.c.h.b16 %v978
          %v1458 = vunpack.c.l.b16 %v979
          %v1459 = vunpack.c.h.b16 %v979
          %v1460 = vunpack.c.l.b16 %v980
          %v1461 = vunpack.c.h.b16 %v980
          %v1462 = vunpack.c.l.b16 %v981
          %v1463 = vunpack.c.h.b16 %v981
          %v1464 = vunpack.c.l.b16 %v982
          %v1465 = vunpack.c.h.b16 %v982
          %v1466 = vunpack.c.l.b16 %v983
          %v1467 = vunpack.c.h.b16 %v983
          %v1468 = vunpack.c.l.b16 %v984
          %v1469 = vunpack.c.h.b16 %v984
          %v1470 = vunpack.c.l.b16 %v985
          %v1471 = vunpack.c.h.b16 %v985
          %v1472 = vunpack.c.l.b16 %v986
          %v1473 = vunpack.c.h.b16 %v986
          %v1474 = vunpack.c.l.b16 %v987
          %v1475 = vunpack.c.h.b16 %v987
          %v1476 = vunpack.c.l.b16 %v988
          %v1477 = vunpack.c.h.b16 %v988
          %v1478 = vunpack.c.l.b16 %v989
          %v1479 = vunpack.c.h.b16 %v989
          %v1480 = vunpack.c.l.b16 %v990
          %v1481 = vunpack.c.h.b16 %v990
          %v1482 = vunpack.c.l.b16 %v991
          %v1483 = vunpack.c.h.b16 %v991
          %v1484 = vunpack.c.l.b16 %v992
          %v1485 = vunpack.c.h.b16 %v992
          %v1486 = vunpack.c.l.b16 %v993
          %v1487 = vunpack.c.h.b16 %v993
          %v1488 = vunpack.c.l.b16 %v994
          %v1489 = vunpack.c.h.b16 %v994
          %v1490 = vunpack.c.l.b16 %v995
          %v1491 = vunpack.c.h.b16 %v995
          %v1492 = vunpack.c.l.b16 %v996
          %v1493 = vunpack.c.h.b16 %v996
          %v1494 = vunpack.c.l.b16 %v997
          %v1495 = vunpack.c.h.b16 %v997
          %v1496 = vunpack.c.l.b16 %v998
          %v1497 = vunpack.c.h.b16 %v998
          %v1498 = vunpack.c.l.b16 %v999
          %v1499 = vunpack.c.h.b16 %v999
          %v1500 = vunpack.c.l.b16 %v1000
          %v1501 = vunpack.c.h.b16 %v1000
          %v1502 = vunpack.c.l.b16 %v1001
          %v1503 = vunpack.c.h.b16 %v1001
          %v1504 = vunpack.c.l.b16 %v1002
          %v1505 = vunpack.c.h.b16 %v1002
          %v1506 = vunpack.c.l.b16 %v1003
          %v1507 = vunpack.c.h.b16 %v1003
          %v1508 = vunpack.c.l.b16 %v1004
          %v1509 = vunpack.c.h.b16 %v1004
          %v1510 = vunpack.c.l.b16 %v1005
          %v1511 = vunpack.c.h.b16 %v1005
          %v1512 = vunpack.c.l.b16 %v1006
          %v1513 = vunpack.c.h.b16 %v1006
          %v1514 = vunpack.c.l.b16 %v1007
          %v1515 = vunpack.c.h.b16 %v1007
          %v1516 = vunpack.c.l.b16 %v1008
          %v1517 = vunpack.c.h.b16 %v1008
          %v1518 = vunpack.c.l.b16 %v1009
          %v1519 = vunpack.c.h.b16 %v1009
          %v1520 = vunpack.c.l.b16 %v1010
          %v1521 = vunpack.c.h.b16 %v1010
          %v1522 = vunpack.c.l.b16 %v1011
          %v1523 = vunpack.c.h.b16 %v1011
          %v1524 = vunpack.c.l.b16 %v1012
          %v1525 = vunpack.c.h.b16 %v1012
          %v1526 = vunpack.c.l.b16 %v1013
          %v1527 = vunpack.c.h.b16 %v1013
          %v1528 = vunpack.c.l.b16 %v1014
          %v1529 = vunpack.c.h.b16 %v1014
          %v1530 = vunpack.c.l.b16 %v1015
          %v1531 = vunpack.c.h.b16 %v1015
          %v1532 = vunpack.c.l.b16 %v1016
          %v1533 = vunpack.c.h.b16 %v1016
          %v1534 = vunpack.c.l.b16 %v1017
          %v1535 = vunpack.c.h.b16 %v1017
          %v1536 = vunpack.c.l.b16 %v1018
          %v1537 = vunpack.c.h.b16 %v1018
          %v1538 = vunpack.c.l.b16 %v1019
          %v1539 = vunpack.c.h.b16 %v1019
          %v1540 = vunpack.c.l.b16 %v1020
          %v1541 = vunpack.c.h.b16 %v1020
          %v1542 = vunpack.c.l.b16 %v1021
          %v1543 = vunpack.c.h.b16 %v1021
          %v1544 = vunpack.c.l.b16 %v1022
          %v1545 = vunpack.c.h.b16 %v1022
          %v1546 = vunpack.c.l.b16 %v1023
          %v1547 = vunpack.c.h.b16 %v1023
          %v1548 = vunpack.c.l.b16 %v1024
          %v1549 = vunpack.c.h.b16 %v1024
          %v1550 = vunpack.c.l.b16 %v1025
          %v1551 = vunpack.c.h.b16 %v1025
          %v1552 = vunpack.c.l.b16 %v1026
          %v1553 = vunpack.c.h.b16 %v1026
          %v1554 = vunpack.c.l.b16 %v1027
          %v1555 = vunpack.c.h.b16 %v1027
          %v1556 = vunpack.c.l.b16 %v1028
          %v1557 = vunpack.c.h.b16 %v1028
          %v1558 = vunpack.c.l.b16 %v1029
          %v1559 = vunpack.c.h.b16 %v1029
          %v1560 = vunpack.c.l.b16 %v1030
          %v1561 = vunpack.c.h.b16 %v1030
          %v1562 = vunpack.c.l.b16 %v1031
          %v1563 = vunpack.c.h.b16 %v1031
          %v1564 = vunpack.c.l.b16 %v1032
          %v1565 = vunpack.c.h.b16 %v1032
          %v1566 = vunpack.c.l.b16 %v1033
          %v1567 = vunpack.c.h.b16 %v1033
          %v1568 = vunpack.c.l.b16 %v1034
          %v1569 = vunpack.c.h.b16 %v1034
          %v1570 = vunpack.c.l.b16 %v1035
          %v1571 = vunpack.c.h.b16 %v1035
          %v1572 = vunpack.c.l.b16 %v1036
          %v1573 = vunpack.c.h.b16 %v1036
          %v1574 = vunpack.c.l.b16 %v1037
          %v1575 = vunpack.c.h.b16 %v1037
          %v1576 = vunpack.c.l.b16 %v1038
          %v1577 = vunpack.c.h.b16 %v1038
          %v1578 = vunpack.c.l.b16 %v1039
          %v1579 = vunpack.c.h.b16 %v1039
          %v1580 = vunpack.c.l.b16 %v1040
          %v1581 = vunpack.c.h.b16 %v1040
          %v1582 = vunpack.c.l.b16 %v1041
          %v1583 = vunpack.c.h.b16 %v1041
          %v1584 = vunpack.c.l.b16 %v1042
          %v1585 = vunpack.c.h.b16 %v1042
          %v1586 = vunpack.c.l.b16 %v1043
          %v1587 = vunpack.c.h.b16 %v1043
          %v1588 = vunpack.c.l.b16 %v1044
          %v1589 = vunpack.c.h.b16 %v1044
          %v1590 = vunpack.c.l.b16 %v1045
          %v1591 = vunpack.c.h.b16 %v1045
          %v1592 = vunpack.c.l.b16 %v1046
          %v1593 = vunpack.c.h.b16 %v1046
          %v1594 = vunpack.c.l.b16 %v1047
          %v1595 = vunpack.c.h.b16 %v1047
          %v1596 = vunpack.c.l.b16 %v1048
          %v1597 = vunpack.c.h.b16 %v1048
          %v1598 = vunpack.c.l.b16 %v1049
          %v1599 = vunpack.c.h.b16 %v1049
          %v1600 = vunpack.c.l.b16 %v1050
          %v1601 = vunpack.c.h.b16 %v1050
          %v1602 = vunpack.c.l.b16 %v1051
          %v1603 = vunpack.c.h.b16 %v1051
          %v1604 = vunpack.c.l.b16 %v1052
          %v1605 = vunpack.c.h.b16 %v1052
          %v1606 = vunpack.c.l.b16 %v1053
          %v1607 = vunpack.c.h.b16 %v1053
          %v1608 = vunpack.c.l.b16 %v1054
          %v1609 = vunpack.c.h.b16 %v1054
          %v1610 = vunpack.c.l.b16 %v1055
          %v1611 = vunpack.c.h.b16 %v1055
          %v1612 = vunpack.c.l.b16 %v1056
          %v1613 = vunpack.c.h.b16 %v1056
          %v1614 = vunpack.c.l.b16 %v1057
          %v1615 = vunpack.c.h.b16 %v1057
          %v1616 = vunpack.c.l.b16 %v1058
          %v1617 = vunpack.c.h.b16 %v1058
          %v1618 = vunpack.c.l.b16 %v1059
          %v1619 = vunpack.c.h.b16 %v1059
          %v1620 = vunpack.c.l.b16 %v1060
          %v1621 = vunpack.c.h.b16 %v1060
          %v1622 = vunpack.c.l.b16 %v1061
          %v1623 = vunpack.c.h.b16 %v1061
          %v1624 = vunpack.c.l.b16 %v1062
          %v1625 = vunpack.c.h.b16 %v1062
          %v1626 = vunpack.c.l.b16 %v1063
          %v1627 = vunpack.c.h.b16 %v1063
          %v1628 = vunpack.c.l.b16 %v1064
          %v1629 = vunpack.c.h.b16 %v1064
          %v1630 = vunpack.c.l.b16 %v1065
          %v1631 = vunpack.c.h.b16 %v1065
          %v1632 = vunpack.c.l.b16 %v1066
          %v1633 = vunpack.c.h.b16 %v1066
          %v1634 = vunpack.c.l.b16 %v1067
          %v1635 = vunpack.c.h.b16 %v1067
          %v1636 = vunpack.c.l.b16 %v1068
          %v1637 = vunpack.c.h.b16 %v1068
          %v1638 = vunpack.c.l.b16 %v1069
          %v1639 = vunpack.c.h.b16 %v1069
          %v1640 = vunpack.c.l.b16 %v1070
          %v1641 = vunpack.c.h.b16 %v1070
          %v1642 = vunpack.c.l.b16 %v1071
          %v1643 = vunpack.c.h.b16 %v1071
          %v1644 = vunpack.c.l.b16 %v1072
          %v1645 = vunpack.c.h.b16 %v1072
          %v1646 = vunpack.c.l.b16 %v1073
          %v1647 = vunpack.c.h.b16 %v1073
          %v1648 = vunpack.c.l.b16 %v1074
          %v1649 = vunpack.c.h.b16 %v1074
          %v1650 = vunpack.c.l.b16 %v1075
          %v1651 = vunpack.c.h.b16 %v1075
          %v1652 = vunpack.c.l.b16 %v1076
          %v1653 = vunpack.c.h.b16 %v1076
          %v1654 = vpack.c.b16 %v1274, %v1270
          %v1655 = vpack.c.b16 %v1275, %v1271
          %v1656 = vpack.c.b16 %v1276, %v1272
          %v1657 = vpack.c.b16 %v1277, %v1273
          %v1658 = vpack.c.b16 %v1282, %v1278
          %v1659 = vpack.c.b16 %v1283, %v1279
          %v1660 = vpack.c.b16 %v1284, %v1280
          %v1661 = vpack.c.b16 %v1285, %v1281
          %v1662 = vpack.c.b16 %v1290, %v1286
          %v1663 = vpack.c.b16 %v1291, %v1287
          %v1664 = vpack.c.b16 %v1292, %v1288
          %v1665 = vpack.c.b16 %v1293, %v1289
          %v1666 = vpack.c.b16 %v1298, %v1294
          %v1667 = vpack.c.b16 %v1299, %v1295
          %v1668 = vpack.c.b16 %v1300, %v1296
          %v1669 = vpack.c.b16 %v1301, %v1297
          %v1670 = vpack.c.b16 %v1306, %v1302
          %v1671 = vpack.c.b16 %v1307, %v1303
          %v1672 = vpack.c.b16 %v1308, %v1304
          %v1673 = vpack.c.b16 %v1309, %v1305
          %v1674 = vpack.c.b16 %v1314, %v1310
          %v1675 = vpack.c.b16 %v1315, %v1311
          %v1676 = vpack.c.b16 %v1316, %v1312
          %v1677 = vpack.c.b16 %v1317, %v1313
          %v1678 = vpack.c.b16 %v1322, %v1318
          %v1679 = vpack.c.b16 %v1323, %v1319
          %v1680 = vpack.c.b16 %v1324, %v1320
          %v1681 = vpack.c.b16 %v1325, %v1321
          %v1682 = vpack.c.b16 %v1330, %v1326
          %v1683 = vpack.c.b16 %v1331, %v1327
          %v1684 = vpack.c.b16 %v1332, %v1328
          %v1685 = vpack.c.b16 %v1333, %v1329
          %v1686 = vpack.c.b16 %v1338, %v1334
          %v1687 = vpack.c.b16 %v1339, %v1335
          %v1688 = vpack.c.b16 %v1340, %v1336
          %v1689 = vpack.c.b16 %v1341, %v1337
          %v1690 = vpack.c.b16 %v1346, %v1342
          %v1691 = vpack.c.b16 %v1347, %v1343
          %v1692 = vpack.c.b16 %v1348, %v1344
          %v1693 = vpack.c.b16 %v1349, %v1345
          %v1694 = vpack.c.b16 %v1354, %v1350
          %v1695 = vpack.c.b16 %v1355, %v1351
          %v1696 = vpack.c.b16 %v1356, %v1352
          %v1697 = vpack.c.b16 %v1357, %v1353
          %v1698 = vpack.c.b16 %v1362, %v1358
          %v1699 = vpack.c.b16 %v1363, %v1359
          %v1700 = vpack.c.b16 %v1364, %v1360
          %v1701 = vpack.c.b16 %v1365, %v1361
          %v1702 = vpack.c.b16 %v1370, %v1366
          %v1703 = vpack.c.b16 %v1371, %v1367
          %v1704 = vpack.c.b16 %v1372, %v1368
          %v1705 = vpack.c.b16 %v1373, %v1369
          %v1706 = vpack.c.b16 %v1378, %v1374
          %v1707 = vpack.c.b16 %v1379, %v1375
          %v1708 = vpack.c.b16 %v1380, %v1376
          %v1709 = vpack.c.b16 %v1381, %v1377
          %v1710 = vpack.c.b16 %v1386, %v1382
          %v1711 = vpack.c.b16 %v1387, %v1383
          %v1712 = vpack.c.b16 %v1388, %v1384
          %v1713 = vpack.c.b16 %v1389, %v1385
          %v1714 = vpack.c.b16 %v1394, %v1390
          %v1715 = vpack.c.b16 %v1395, %v1391
          %v1716 = vpack.c.b16 %v1396, %v1392
          %v1717 = vpack.c.b16 %v1397, %v1393
          %v1718 = vpack.c.b16 %v1402, %v1398
          %v1719 = vpack.c.b16 %v1403, %v1399
          %v1720 = vpack.c.b16 %v1404, %v1400
          %v1721 = vpack.c.b16 %v1405, %v1401
          %v1722 = vpack.c.b16 %v1410, %v1406
          %v1723 = vpack.c.b16 %v1411, %v1407
          %v1724 = vpack.c.b16 %v1412, %v1408
          %v1725 = vpack.c.b16 %v1413, %v1409
          %v1726 = vpack.c.b16 %v1418, %v1414
          %v1727 = vpack.c.b16 %v1419, %v1415
          %v1728 = vpack.c.b16 %v1420, %v1416
          %v1729 = vpack.c.b16 %v1421, %v1417
          %v1730 = vpack.c.b16 %v1426, %v1422
          %v1731 = vpack.c.b16 %v1427, %v1423
          %v1732 = vpack.c.b16 %v1428, %v1424
          %v1733 = vpack.c.b16 %v1429, %v1425
          %v1734 = vpack.c.b16 %v1434, %v1430
          %v1735 = vpack.c.b16 %v1435, %v1431
          %v1736 = vpack.c.b16 %v1436, %v1432
          %v1737 = vpack.c.b16 %v1437, %v1433
          %v1738 = vpack.c.b16 %v1442, %v1438
          %v1739 = vpack.c.b16 %v1443, %v1439
          %v1740 = vpack.c.b16 %v1444, %v1440
          %v1741 = vpack.c.b16 %v1445, %v1441
          %v1742 = vpack.c.b16 %v1450, %v1446
          %v1743 = vpack.c.b16 %v1451, %v1447
          %v1744 = vpack.c.b16 %v1452, %v1448
          %v1745 = vpack.c.b16 %v1453, %v1449
          %v1746 = vpack.c.b16 %v1458, %v1454
          %v1747 = vpack.c.b16 %v1459, %v1455
          %v1748 = vpack.c.b16 %v1460, %v1456
          %v1749 = vpack.c.b16 %v1461, %v1457
          %v1750 = vpack.c.b16 %v1466, %v1462
          %v1751 = vpack.c.b16 %v1467, %v1463
          %v1752 = vpack.c.b16 %v1468, %v1464
          %v1753 = vpack.c.b16 %v1469, %v1465
          %v1754 = vpack.c.b16 %v1474, %v1470
          %v1755 = vpack.c.b16 %v1475, %v1471
          %v1756 = vpack.c.b16 %v1476, %v1472
          %v1757 = vpack.c.b16 %v1477, %v1473
          %v1758 = vpack.c.b16 %v1482, %v1478
          %v1759 = vpack.c.b16 %v1483, %v1479
          %v1760 = vpack.c.b16 %v1484, %v1480
          %v1761 = vpack.c.b16 %v1485, %v1481
          %v1762 = vpack.c.b16 %v1490, %v1486
          %v1763 = vpack.c.b16 %v1491, %v1487
          %v1764 = vpack.c.b16 %v1492, %v1488
          %v1765 = vpack.c.b16 %v1493, %v1489
          %v1766 = vpack.c.b16 %v1498, %v1494
          %v1767 = vpack.c.b16 %v1499, %v1495
          %v1768 = vpack.c.b16 %v1500, %v1496
          %v1769 = vpack.c.b16 %v1501, %v1497
          %v1770 = vpack.c.b16 %v1506, %v1502
          %v1771 = vpack.c.b16 %v1507, %v1503
          %v1772 = vpack.c.b16 %v1508, %v1504
          %v1773 = vpack.c.b16 %v1509, %v1505
          %v1774 = vpack.c.b16 %v1514, %v1510
          %v1775 = vpack.c.b16 %v1515, %v1511
          %v1776 = vpack.c.b16 %v1516, %v1512
          %v1777 = vpack.c.b16 %v1517, %v1513
          %v1778 = vpack.c.b16 %v1522, %v1518
          %v1779 = vpack.c.b16 %v1523, %v1519
          %v1780 = vpack.c.b16 %v1524, %v1520
          %v1781 = vpack.c.b16 %v1525, %v1521
          %v1782 = vpack.c.b16 %v1530, %v1526
          %v1783 = vpack.c.b16 %v1531, %v1527
          %v1784 = vpack.c.b16 %v1532, %v1528
          %v1785 = vpack.c.b16 %v1533, %v1529
          %v1786 = vpack.c.b16 %v1538, %v1534
          %v1787 = vpack.c.b16 %v1539, %v1535
          %v1788 = vpack.c.b16 %v1540, %v1536
          %v1789 = vpack.c.b16 %v1541, %v1537
          %v1790 = vpack.c.b16 %v1546, %v1542
          %v1791 = vpack.c.b16 %v1547, %v1543
          %v1792 = vpack.c.b16 %v1548, %v1544
          %v1793 = vpack.c.b16 %v1549, %v1545
          %v1794 = vpack.c.b16 %v1554, %v1550
          %v1795 = vpack.c.b16 %v1555, %v1551
          %v1796 = vpack.c.b16 %v1556, %v1552
          %v1797 = vpack.c.b16 %v1557, %v1553
          %v1798 = vpack.c.b16 %v1562, %v1558
          %v1799 = vpack.c.b16 %v1563, %v1559
          %v1800 = vpack.c.b16 %v1564, %v1560
          %v1801 = vpack.c.b16 %v1565, %v1561
          %v1802 = vpack.c.b16 %v1570, %v1566
          %v1803 = vpack.c.b16 %v1571, %v1567
          %v1804 = vpack.c.b16 %v1572, %v1568
          %v1805 = vpack.c.b16 %v1573, %v1569
          %v1806 = vpack.c.b16 %v1578, %v1574
          %v1807 = vpack.c.b16 %v1579, %v1575
          %v1808 = vpack.c.b16 %v1580, %v1576
          %v1809 = vpack.c.b16 %v1581, %v1577
          %v1810 = vpack.c.b16 %v1586, %v1582
          %v1811 = vpack.c.b16 %v1587, %v1583
          %v1812 = vpack.c.b16 %v1588, %v1584
          %v1813 = vpack.c.b16 %v1589, %v1585
          %v1814 = vpack.c.b16 %v1594, %v1590
          %v1815 = vpack.c.b16 %v1595, %v1591
          %v1816 = vpack.c.b16 %v1596, %v1592
          %v1817 = vpack.c.b16 %v1597, %v1593
          %v1818 = vpack.c.b16 %v1602, %v1598
          %v1819 = vpack.c.b16 %v1603, %v1599
          %v1820 = vpack.c.b16 %v1604, %v1600
          %v1821 = vpack.c.b16 %v1605, %v1601
          %v1822 = vpack.c.b16 %v1610, %v1606
          %v1823 = vpack.c.b16 %v1611, %v1607
          %v1824 = vpack.c.b16 %v1612, %v1608
          %v1825 = vpack.c.b16 %v1613, %v1609
          %v1826 = vpack.c.b16 %v1618, %v1614
          %v1827 = vpack.c.b16 %v1619, %v1615
          %v1828 = vpack.c.b16 %v1620, %v1616
          %v1829 = vpack.c.b16 %v1621, %v1617
          %v1830 = vpack.c.b16 %v1626, %v1622
          %v1831 = vpack.c.b16 %v1627, %v1623
          %v1832 = vpack.c.b16 %v1628, %v1624
          %v1833 = vpack.c.b16 %v1629, %v1625
          %v1834 = vpack.c.b16 %v1634, %v1630
          %v1835 = vpack.c.b16 %v1635, %v1631
          %v1836 = vpack.c.b16 %v1636, %v1632
          %v1837 = vpack.c.b16 %v1637, %v1633
          %v1838 = vpack.c.b16 %v1642, %v1638
          %v1839 = vpack.c.b16 %v1643, %v1639
          %v1840 = vpack.c.b16 %v1644, %v1640
          %v1841 = vpack.c.b16 %v1645, %v1641
          %v1842 = vpack.c.b16 %v1650, %v1646
          %v1843 = vpack.c.b16 %v1651, %v1647
          %v1844 = vpack.c.b16 %v1652, %v1648
          %v1845 = vpack.c.b16 %v1653, %v1649
          %v2039 = vlaneseq
          %v2040 = vshrl.u32 %v2039, 7
          %v2041 = vsub.s32 0, %v2040
          %v2042 = vrot.slane %v1077, %v2041
          %v2043 = vlaneseq
          %v2044 = vshrl.u32 %v2043, 7
          %v2045 = vsub.s32 1, %v2044
          %v2046 = vrot.slane %v1077, %v2045
          %v2047 = vlaneseq
          %v2048 = vshrl.u32 %v2047, 7
          %v2049 = vsub.s32 2, %v2048
          %v2050 = vrot.slane %v1077, %v2049
          %v2051 = vlaneseq
          %v2052 = vshrl.u32 %v2051, 7
          %v2053 = vsub.s32 3, %v2052
          %v2054 = vrot.slane %v1077, %v2053
          %2059 = vmatprep.subr.bf16.mxu0 %v1683
          %2060 = vmatpush1.bf16.msra.mxu0 %v1682
          %2061 = vmatprep.subr.bf16.mxu0 %v1679
          %2062 = vmatpush1.bf16.msra.mxu0 %v1678
          %2063 = vmatprep.subr.bf16.mxu0 %v1675
          %2064 = vmatpush1.bf16.msra.mxu0 %v1674
          %2065 = vmatprep.subr.bf16.mxu0 %v1671
          %2066 = vmatpush1.bf16.msra.mxu0 %v1670
          %2067 = vmatprep.subr.bf16.mxu0 %v1667
          %2068 = vmatpush1.bf16.msra.mxu0 %v1666
          %2069 = vmatprep.subr.bf16.mxu0 %v1663
          %2070 = vmatpush1.bf16.msra.mxu0 %v1662
          %2071 = vmatprep.subr.bf16.mxu0 %v1659
          %2072 = vmatpush1.bf16.msra.mxu0 %v1658
          %2073 = vmatprep.subr.bf16.mxu0 %v1655
          %2074 = vmatpush1.bf16.msra.mxu0 %v1654
          %2075 = vmatprep.subr.bf16.mxu0 %v1715
          %2076 = vmatpush2.bf16.msra.mxu0 %v1714
          %2077 = vmatprep.subr.bf16.mxu0 %v1711
          %2078 = vmatpush2.bf16.msra.mxu0 %v1710
          %2079 = vmatprep.subr.bf16.mxu0 %v1707
          %2080 = vmatpush2.bf16.msra.mxu0 %v1706
          %2081 = vmatprep.subr.bf16.mxu0 %v1703
          %2082 = vmatpush2.bf16.msra.mxu0 %v1702
          %2083 = vmatprep.subr.bf16.mxu0 %v1699
          %2084 = vmatpush2.bf16.msra.mxu0 %v1698
          %2085 = vmatprep.subr.bf16.mxu0 %v1695
          %2086 = vmatpush2.bf16.msra.mxu0 %v1694
          %2087 = vmatprep.subr.bf16.mxu0 %v1691
          %2088 = vmatpush2.bf16.msra.mxu0 %v1690
          %2089 = vmatprep.subr.bf16.mxu0 %v1687
          %2090 = vmatpush2.bf16.msra.mxu0 %v1686
          %2091 = vmatprep.mubr.bf16.mxu0 %v880
          %2092 = vmatmul.mubr.bf16.gmra.mxu0 %v879
          %v2093 = vpop.f32.mrf.mxu0
          %v2094 = vadd.f32 %v2042, %v2093
          %v2095 = vpop.f32.mrf.mxu0
          %v2096 = vadd.f32 %v2046, %v2095
          %v2097 = vpop.f32.mrf.mxu0
          %v2098 = vpop.f32.mrf.mxu0
          %2099 = vdwg.mxu0
          %2100 = vmatprep.subr.bf16.mxu0 %v1747
          %2101 = vmatpush1.bf16.msra.mxu0 %v1746
          %2102 = vmatprep.subr.bf16.mxu0 %v1743
          %2103 = vmatpush1.bf16.msra.mxu0 %v1742
          %2104 = vmatprep.subr.bf16.mxu0 %v1739
          %2105 = vmatpush1.bf16.msra.mxu0 %v1738
          %2106 = vmatprep.subr.bf16.mxu0 %v1735
          %2107 = vmatpush1.bf16.msra.mxu0 %v1734
          %2108 = vmatprep.subr.bf16.mxu0 %v1731
          %2109 = vmatpush1.bf16.msra.mxu0 %v1730
          %2110 = vmatprep.subr.bf16.mxu0 %v1727
          %2111 = vmatpush1.bf16.msra.mxu0 %v1726
          %2112 = vmatprep.subr.bf16.mxu0 %v1723
          %2113 = vmatpush1.bf16.msra.mxu0 %v1722
          %2114 = vmatprep.subr.bf16.mxu0 %v1719
          %2115 = vmatpush1.bf16.msra.mxu0 %v1718
          %2116 = vmatprep.subr.bf16.mxu0 %v1779
          %2117 = vmatpush2.bf16.msra.mxu0 %v1778
          %2118 = vmatprep.subr.bf16.mxu0 %v1775
          %2119 = vmatpush2.bf16.msra.mxu0 %v1774
          %2120 = vmatprep.subr.bf16.mxu0 %v1771
          %2121 = vmatpush2.bf16.msra.mxu0 %v1770
          %2122 = vmatprep.subr.bf16.mxu0 %v1767
          %2123 = vmatpush2.bf16.msra.mxu0 %v1766
          %2124 = vmatprep.subr.bf16.mxu0 %v1763
          %2125 = vmatpush2.bf16.msra.mxu0 %v1762
          %2126 = vmatprep.subr.bf16.mxu0 %v1759
          %2127 = vmatpush2.bf16.msra.mxu0 %v1758
          %2128 = vmatprep.subr.bf16.mxu0 %v1755
          %2129 = vmatpush2.bf16.msra.mxu0 %v1754
          %2130 = vmatprep.subr.bf16.mxu0 %v1751
          %2131 = vmatpush2.bf16.msra.mxu0 %v1750
          %2132 = vmatprep.mubr.bf16.mxu0 %v882
          %2133 = vmatmul.mubr.bf16.gmra.mxu0 %v881
          %v2134 = vpop.f32.mrf.mxu0
          %v2135 = vadd.f32 %v2094, %v2134
          %v2136 = vpop.f32.mrf.mxu0
          %v2137 = vadd.f32 %v2096, %v2136
          %v2138 = vpop.f32.mrf.mxu0
          %v2139 = vpop.f32.mrf.mxu0
          %2140 = vdwg.mxu0
          %2141 = vmatprep.subr.bf16.mxu0 %v1811
          %2142 = vmatpush1.bf16.msra.mxu0 %v1810
          %2143 = vmatprep.subr.bf16.mxu0 %v1807
          %2144 = vmatpush1.bf16.msra.mxu0 %v1806
          %2145 = vmatprep.subr.bf16.mxu0 %v1803
          %2146 = vmatpush1.bf16.msra.mxu0 %v1802
          %2147 = vmatprep.subr.bf16.mxu0 %v1799
          %2148 = vmatpush1.bf16.msra.mxu0 %v1798
          %2149 = vmatprep.subr.bf16.mxu0 %v1795
          %2150 = vmatpush1.bf16.msra.mxu0 %v1794
          %2151 = vmatprep.subr.bf16.mxu0 %v1791
          %2152 = vmatpush1.bf16.msra.mxu0 %v1790
          %2153 = vmatprep.subr.bf16.mxu0 %v1787
          %2154 = vmatpush1.bf16.msra.mxu0 %v1786
          %2155 = vmatprep.subr.bf16.mxu0 %v1783
          %2156 = vmatpush1.bf16.msra.mxu0 %v1782
          %2157 = vmatprep.subr.bf16.mxu0 %v1843
          %2158 = vmatpush2.bf16.msra.mxu0 %v1842
          %2159 = vmatprep.subr.bf16.mxu0 %v1839
          %2160 = vmatpush2.bf16.msra.mxu0 %v1838
          %2161 = vmatprep.subr.bf16.mxu0 %v1835
          %2162 = vmatpush2.bf16.msra.mxu0 %v1834
          %2163 = vmatprep.subr.bf16.mxu0 %v1831
          %2164 = vmatpush2.bf16.msra.mxu0 %v1830
          %2165 = vmatprep.subr.bf16.mxu0 %v1827
          %2166 = vmatpush2.bf16.msra.mxu0 %v1826
          %2167 = vmatprep.subr.bf16.mxu0 %v1823
          %2168 = vmatpush2.bf16.msra.mxu0 %v1822
          %2169 = vmatprep.subr.bf16.mxu0 %v1819
          %2170 = vmatpush2.bf16.msra.mxu0 %v1818
          %2171 = vmatprep.subr.bf16.mxu0 %v1815
          %2172 = vmatpush2.bf16.msra.mxu0 %v1814
          %2173 = vmatprep.mubr.bf16.mxu0 %v884
          %2174 = vmatmul.mubr.bf16.gmra.mxu0 %v883
          %v2175 = vpop.f32.mrf.mxu0
          %v2176 = vadd.f32 %v2135, %v2175
          %v2177 = vpop.f32.mrf.mxu0
          %v2178 = vadd.f32 %v2137, %v2177
          %v2179 = vpop.f32.mrf.mxu0
          %v2180 = vpop.f32.mrf.mxu0
          %2181 = vdwg.mxu0
          %2182 = vmatprep.subr.bf16.mxu0 %v1685
          %2183 = vmatpush1.bf16.msra.mxu0 %v1684
          %2184 = vmatprep.subr.bf16.mxu0 %v1681
          %2185 = vmatpush1.bf16.msra.mxu0 %v1680
          %2186 = vmatprep.subr.bf16.mxu0 %v1677
          %2187 = vmatpush1.bf16.msra.mxu0 %v1676
          %2188 = vmatprep.subr.bf16.mxu0 %v1673
          %2189 = vmatpush1.bf16.msra.mxu0 %v1672
          %2190 = vmatprep.subr.bf16.mxu0 %v1669
          %2191 = vmatpush1.bf16.msra.mxu0 %v1668
          %2192 = vmatprep.subr.bf16.mxu0 %v1665
          %2193 = vmatpush1.bf16.msra.mxu0 %v1664
          %2194 = vmatprep.subr.bf16.mxu0 %v1661
          %2195 = vmatpush1.bf16.msra.mxu0 %v1660
          %2196 = vmatprep.subr.bf16.mxu0 %v1657
          %2197 = vmatpush1.bf16.msra.mxu0 %v1656
          %2198 = vmatprep.subr.bf16.mxu0 %v1717
          %2199 = vmatpush2.bf16.msra.mxu0 %v1716
          %2200 = vmatprep.subr.bf16.mxu0 %v1713
          %2201 = vmatpush2.bf16.msra.mxu0 %v1712
          %2202 = vmatprep.subr.bf16.mxu0 %v1709
          %2203 = vmatpush2.bf16.msra.mxu0 %v1708
          %2204 = vmatprep.subr.bf16.mxu0 %v1705
          %2205 = vmatpush2.bf16.msra.mxu0 %v1704
          %2206 = vmatprep.subr.bf16.mxu0 %v1701
          %2207 = vmatpush2.bf16.msra.mxu0 %v1700
          %2208 = vmatprep.subr.bf16.mxu0 %v1697
          %2209 = vmatpush2.bf16.msra.mxu0 %v1696
          %2210 = vmatprep.subr.bf16.mxu0 %v1693
          %2211 = vmatpush2.bf16.msra.mxu0 %v1692
          %2212 = vmatprep.subr.bf16.mxu0 %v1689
          %2213 = vmatpush2.bf16.msra.mxu0 %v1688
          %2214 = vmatprep.mubr.bf16.mxu0 %v880
          %2215 = vmatmul.mubr.bf16.gmra.mxu0 %v879
          %v2216 = vpop.f32.mrf.mxu0
          %v2217 = vadd.f32 %v2050, %v2216
          %v2218 = vpop.f32.mrf.mxu0
          %v2219 = vadd.f32 %v2054, %v2218
          %v2220 = vpop.f32.mrf.mxu0
          %v2221 = vpop.f32.mrf.mxu0
          %2222 = vdwg.mxu0
          %2223 = vmatprep.subr.bf16.mxu0 %v1749
          %2224 = vmatpush1.bf16.msra.mxu0 %v1748
          %2225 = vmatprep.subr.bf16.mxu0 %v1745
          %2226 = vmatpush1.bf16.msra.mxu0 %v1744
          %2227 = vmatprep.subr.bf16.mxu0 %v1741
          %2228 = vmatpush1.bf16.msra.mxu0 %v1740
          %2229 = vmatprep.subr.bf16.mxu0 %v1737
          %2230 = vmatpush1.bf16.msra.mxu0 %v1736
          %2231 = vmatprep.subr.bf16.mxu0 %v1733
          %2232 = vmatpush1.bf16.msra.mxu0 %v1732
          %2233 = vmatprep.subr.bf16.mxu0 %v1729
          %2234 = vmatpush1.bf16.msra.mxu0 %v1728
          %2235 = vmatprep.subr.bf16.mxu0 %v1725
          %2236 = vmatpush1.bf16.msra.mxu0 %v1724
          %2237 = vmatprep.subr.bf16.mxu0 %v1721
          %2238 = vmatpush1.bf16.msra.mxu0 %v1720
          %2239 = vmatprep.subr.bf16.mxu0 %v1781
          %2240 = vmatpush2.bf16.msra.mxu0 %v1780
          %2241 = vmatprep.subr.bf16.mxu0 %v1777
          %2242 = vmatpush2.bf16.msra.mxu0 %v1776
          %2243 = vmatprep.subr.bf16.mxu0 %v1773
          %2244 = vmatpush2.bf16.msra.mxu0 %v1772
          %2245 = vmatprep.subr.bf16.mxu0 %v1769
          %2246 = vmatpush2.bf16.msra.mxu0 %v1768
          %2247 = vmatprep.subr.bf16.mxu0 %v1765
          %2248 = vmatpush2.bf16.msra.mxu0 %v1764
          %2249 = vmatprep.subr.bf16.mxu0 %v1761
          %2250 = vmatpush2.bf16.msra.mxu0 %v1760
          %2251 = vmatprep.subr.bf16.mxu0 %v1757
          %2252 = vmatpush2.bf16.msra.mxu0 %v1756
          %2253 = vmatprep.subr.bf16.mxu0 %v1753
          %2254 = vmatpush2.bf16.msra.mxu0 %v1752
          %2255 = vmatprep.mubr.bf16.mxu0 %v882
          %2256 = vmatmul.mubr.bf16.gmra.mxu0 %v881
          %v2257 = vpop.f32.mrf.mxu0
          %v2258 = vadd.f32 %v2217, %v2257
          %v2259 = vpop.f32.mrf.mxu0
          %v2260 = vadd.f32 %v2219, %v2259
          %v2261 = vpop.f32.mrf.mxu0
          %v2262 = vpop.f32.mrf.mxu0
          %2263 = vdwg.mxu0
          %2264 = vmatprep.subr.bf16.mxu0 %v1813
          %2265 = vmatpush1.bf16.msra.mxu0 %v1812
          %2266 = vmatprep.subr.bf16.mxu0 %v1809
          %2267 = vmatpush1.bf16.msra.mxu0 %v1808
          %2268 = vmatprep.subr.bf16.mxu0 %v1805
          %2269 = vmatpush1.bf16.msra.mxu0 %v1804
          %2270 = vmatprep.subr.bf16.mxu0 %v1801
          %2271 = vmatpush1.bf16.msra.mxu0 %v1800
          %2272 = vmatprep.subr.bf16.mxu0 %v1797
          %2273 = vmatpush1.bf16.msra.mxu0 %v1796
          %2274 = vmatprep.subr.bf16.mxu0 %v1793
          %2275 = vmatpush1.bf16.msra.mxu0 %v1792
          %2276 = vmatprep.subr.bf16.mxu0 %v1789
          %2277 = vmatpush1.bf16.msra.mxu0 %v1788
          %2278 = vmatprep.subr.bf16.mxu0 %v1785
          %2279 = vmatpush1.bf16.msra.mxu0 %v1784
          %2280 = vmatprep.subr.bf16.mxu0 %v1845
          %2281 = vmatpush2.bf16.msra.mxu0 %v1844
          %2282 = vmatprep.subr.bf16.mxu0 %v1841
          %2283 = vmatpush2.bf16.msra.mxu0 %v1840
          %2284 = vmatprep.subr.bf16.mxu0 %v1837
          %2285 = vmatpush2.bf16.msra.mxu0 %v1836
          %2286 = vmatprep.subr.bf16.mxu0 %v1833
          %2287 = vmatpush2.bf16.msra.mxu0 %v1832
          %2288 = vmatprep.subr.bf16.mxu0 %v1829
          %2289 = vmatpush2.bf16.msra.mxu0 %v1828
          %2290 = vmatprep.subr.bf16.mxu0 %v1825
          %2291 = vmatpush2.bf16.msra.mxu0 %v1824
          %2292 = vmatprep.subr.bf16.mxu0 %v1821
          %2293 = vmatpush2.bf16.msra.mxu0 %v1820
          %2294 = vmatprep.subr.bf16.mxu0 %v1817
          %2295 = vmatpush2.bf16.msra.mxu0 %v1816
          %2296 = vmatprep.mubr.bf16.mxu0 %v884
          %2297 = vmatmul.mubr.bf16.gmra.mxu0 %v883
          %v2298 = vpop.f32.mrf.mxu0
          %v2299 = vadd.f32 %v2258, %v2298
          %v2300 = vpop.f32.mrf.mxu0
          %v2301 = vadd.f32 %v2260, %v2300
          %v2302 = vpop.f32.mrf.mxu0
          %v2303 = vpop.f32.mrf.mxu0
          %2304 = vdwg.mxu0
          %v2305 = vpack.c.bf16 %v2176, %v2176
          %v2306 = vpack.c.bf16 %v2178, %v2178
          %v2307 = vpack.c.bf16 %v2299, %v2299
          %v2308 = vpack.c.bf16 %v2301, %v2301
          %v2309 = vld [vmem:[#allocation11] sm:$0xff]
          %v2310 = vld [vmem:[#allocation11 + $0x8] sm:$0xff]
          %v2311 = vld [vmem:[#allocation11 + $0x10] sm:$0xff]
          %v2312 = vld [vmem:[#allocation11 + $0x18] sm:$0xff]
          %v2313 = vld [vmem:[#allocation11 + $0x20] sm:$0xff]
          %v2314 = vld [vmem:[#allocation11 + $0x28] sm:$0xff]
          %v2315 = vld [vmem:[#allocation11 + $0x30] sm:$0xff]
          %v2316 = vld [vmem:[#allocation11 + $0x38] sm:$0xff]
          %v2317 = vld [vmem:[#allocation11 + $0x40] sm:$0xff]
          %v2318 = vld [vmem:[#allocation11 + $0x48] sm:$0xff]
          %v2319 = vld [vmem:[#allocation11 + $0x50] sm:$0xff]
          %v2320 = vld [vmem:[#allocation11 + $0x58] sm:$0xff]
          %v2321 = vld [vmem:[#allocation11 + $0x60] sm:$0xff]
          %v2322 = vld [vmem:[#allocation11 + $0x68] sm:$0xff]
          %v2323 = vld [vmem:[#allocation11 + $0x70] sm:$0xff]
          %v2324 = vld [vmem:[#allocation11 + $0x78] sm:$0xff]
          %v2325 = vld [vmem:[#allocation11 + $0x80] sm:$0xff]
          %v2326 = vld [vmem:[#allocation11 + $0x88] sm:$0xff]
          %v2327 = vld [vmem:[#allocation11 + $0x90] sm:$0xff]
          %v2328 = vld [vmem:[#allocation11 + $0x98] sm:$0xff]
          %v2329 = vld [vmem:[#allocation11 + $0xa0] sm:$0xff]
          %v2330 = vld [vmem:[#allocation11 + $0xa8] sm:$0xff]
          %v2331 = vld [vmem:[#allocation11 + $0xb0] sm:$0xff]
          %v2332 = vld [vmem:[#allocation11 + $0xb8] sm:$0xff]
          %v2333 = vld [vmem:[#allocation11 + $0xc0] sm:$0xff]
          %v2334 = vld [vmem:[#allocation11 + $0xc8] sm:$0xff]
          %v2335 = vld [vmem:[#allocation11 + $0xd0] sm:$0xff]
          %v2336 = vld [vmem:[#allocation11 + $0xd8] sm:$0xff]
          %v2337 = vld [vmem:[#allocation11 + $0xe0] sm:$0xff]
          %v2338 = vld [vmem:[#allocation11 + $0xe8] sm:$0xff]
          %v2339 = vld [vmem:[#allocation11 + $0xf0] sm:$0xff]
          %v2340 = vld [vmem:[#allocation11 + $0xf8] sm:$0xff]
          %v2341 = vld [vmem:[#allocation11 + $0x100] sm:$0xff]
          %v2342 = vld [vmem:[#allocation11 + $0x108] sm:$0xff]
          %v2343 = vld [vmem:[#allocation11 + $0x110] sm:$0xff]
          %v2344 = vld [vmem:[#allocation11 + $0x118] sm:$0xff]
          %v2345 = vld [vmem:[#allocation11 + $0x120] sm:$0xff]
          %v2346 = vld [vmem:[#allocation11 + $0x128] sm:$0xff]
          %v2347 = vld [vmem:[#allocation11 + $0x130] sm:$0xff]
          %v2348 = vld [vmem:[#allocation11 + $0x138] sm:$0xff]
          %v2349 = vld [vmem:[#allocation11 + $0x140] sm:$0xff]
          %v2350 = vld [vmem:[#allocation11 + $0x148] sm:$0xff]
          %v2351 = vld [vmem:[#allocation11 + $0x150] sm:$0xff]
          %v2352 = vld [vmem:[#allocation11 + $0x158] sm:$0xff]
          %v2353 = vld [vmem:[#allocation11 + $0x160] sm:$0xff]
          %v2354 = vld [vmem:[#allocation11 + $0x168] sm:$0xff]
          %v2355 = vld [vmem:[#allocation11 + $0x170] sm:$0xff]
          %v2356 = vld [vmem:[#allocation11 + $0x178] sm:$0xff]
          %v2357 = vld [vmem:[#allocation11 + $0x180] sm:$0xff]
          %v2358 = vld [vmem:[#allocation11 + $0x188] sm:$0xff]
          %v2359 = vld [vmem:[#allocation11 + $0x190] sm:$0xff]
          %v2360 = vld [vmem:[#allocation11 + $0x198] sm:$0xff]
          %v2361 = vld [vmem:[#allocation11 + $0x1a0] sm:$0xff]
          %v2362 = vld [vmem:[#allocation11 + $0x1a8] sm:$0xff]
          %v2363 = vld [vmem:[#allocation11 + $0x1b0] sm:$0xff]
          %v2364 = vld [vmem:[#allocation11 + $0x1b8] sm:$0xff]
          %v2365 = vld [vmem:[#allocation11 + $0x1c0] sm:$0xff]
          %v2366 = vld [vmem:[#allocation11 + $0x1c8] sm:$0xff]
          %v2367 = vld [vmem:[#allocation11 + $0x1d0] sm:$0xff]
          %v2368 = vld [vmem:[#allocation11 + $0x1d8] sm:$0xff]
          %v2369 = vld [vmem:[#allocation11 + $0x1e0] sm:$0xff]
          %v2370 = vld [vmem:[#allocation11 + $0x1e8] sm:$0xff]
          %v2371 = vld [vmem:[#allocation11 + $0x1f0] sm:$0xff]
          %v2372 = vld [vmem:[#allocation11 + $0x1f8] sm:$0xff]
          %v2373 = vld [vmem:[%s6] sm:$0x3]
          %v2438 = vunpack.c.l.b16 %v2309
          %v2439 = vunpack.c.h.b16 %v2309
          %v2440 = vunpack.c.l.b16 %v2310
          %v2441 = vunpack.c.h.b16 %v2310
          %v2442 = vunpack.c.l.b16 %v2311
          %v2443 = vunpack.c.h.b16 %v2311
          %v2444 = vunpack.c.l.b16 %v2312
          %v2445 = vunpack.c.h.b16 %v2312
          %v2446 = vunpack.c.l.b16 %v2313
          %v2447 = vunpack.c.h.b16 %v2313
          %v2448 = vunpack.c.l.b16 %v2314
          %v2449 = vunpack.c.h.b16 %v2314
          %v2450 = vunpack.c.l.b16 %v2315
          %v2451 = vunpack.c.h.b16 %v2315
          %v2452 = vunpack.c.l.b16 %v2316
          %v2453 = vunpack.c.h.b16 %v2316
          %v2454 = vunpack.c.l.b16 %v2317
          %v2455 = vunpack.c.h.b16 %v2317
          %v2456 = vunpack.c.l.b16 %v2318
          %v2457 = vunpack.c.h.b16 %v2318
          %v2458 = vunpack.c.l.b16 %v2319
          %v2459 = vunpack.c.h.b16 %v2319
          %v2460 = vunpack.c.l.b16 %v2320
          %v2461 = vunpack.c.h.b16 %v2320
          %v2462 = vunpack.c.l.b16 %v2321
          %v2463 = vunpack.c.h.b16 %v2321
          %v2464 = vunpack.c.l.b16 %v2322
          %v2465 = vunpack.c.h.b16 %v2322
          %v2466 = vunpack.c.l.b16 %v2323
          %v2467 = vunpack.c.h.b16 %v2323
          %v2468 = vunpack.c.l.b16 %v2324
          %v2469 = vunpack.c.h.b16 %v2324
          %v2470 = vunpack.c.l.b16 %v2325
          %v2471 = vunpack.c.h.b16 %v2325
          %v2472 = vunpack.c.l.b16 %v2326
          %v2473 = vunpack.c.h.b16 %v2326
          %v2474 = vunpack.c.l.b16 %v2327
          %v2475 = vunpack.c.h.b16 %v2327
          %v2476 = vunpack.c.l.b16 %v2328
          %v2477 = vunpack.c.h.b16 %v2328
          %v2478 = vunpack.c.l.b16 %v2329
          %v2479 = vunpack.c.h.b16 %v2329
          %v2480 = vunpack.c.l.b16 %v2330
          %v2481 = vunpack.c.h.b16 %v2330
          %v2482 = vunpack.c.l.b16 %v2331
          %v2483 = vunpack.c.h.b16 %v2331
          %v2484 = vunpack.c.l.b16 %v2332
          %v2485 = vunpack.c.h.b16 %v2332
          %v2486 = vunpack.c.l.b16 %v2333
          %v2487 = vunpack.c.h.b16 %v2333
          %v2488 = vunpack.c.l.b16 %v2334
          %v2489 = vunpack.c.h.b16 %v2334
          %v2490 = vunpack.c.l.b16 %v2335
          %v2491 = vunpack.c.h.b16 %v2335
          %v2492 = vunpack.c.l.b16 %v2336
          %v2493 = vunpack.c.h.b16 %v2336
          %v2494 = vunpack.c.l.b16 %v2337
          %v2495 = vunpack.c.h.b16 %v2337
          %v2496 = vunpack.c.l.b16 %v2338
          %v2497 = vunpack.c.h.b16 %v2338
          %v2498 = vunpack.c.l.b16 %v2339
          %v2499 = vunpack.c.h.b16 %v2339
          %v2500 = vunpack.c.l.b16 %v2340
          %v2501 = vunpack.c.h.b16 %v2340
          %v2502 = vunpack.c.l.b16 %v2341
          %v2503 = vunpack.c.h.b16 %v2341
          %v2504 = vunpack.c.l.b16 %v2342
          %v2505 = vunpack.c.h.b16 %v2342
          %v2506 = vunpack.c.l.b16 %v2343
          %v2507 = vunpack.c.h.b16 %v2343
          %v2508 = vunpack.c.l.b16 %v2344
          %v2509 = vunpack.c.h.b16 %v2344
          %v2510 = vunpack.c.l.b16 %v2345
          %v2511 = vunpack.c.h.b16 %v2345
          %v2512 = vunpack.c.l.b16 %v2346
          %v2513 = vunpack.c.h.b16 %v2346
          %v2514 = vunpack.c.l.b16 %v2347
          %v2515 = vunpack.c.h.b16 %v2347
          %v2516 = vunpack.c.l.b16 %v2348
          %v2517 = vunpack.c.h.b16 %v2348
          %v2518 = vunpack.c.l.b16 %v2349
          %v2519 = vunpack.c.h.b16 %v2349
          %v2520 = vunpack.c.l.b16 %v2350
          %v2521 = vunpack.c.h.b16 %v2350
          %v2522 = vunpack.c.l.b16 %v2351
          %v2523 = vunpack.c.h.b16 %v2351
          %v2524 = vunpack.c.l.b16 %v2352
          %v2525 = vunpack.c.h.b16 %v2352
          %v2526 = vunpack.c.l.b16 %v2353
          %v2527 = vunpack.c.h.b16 %v2353
          %v2528 = vunpack.c.l.b16 %v2354
          %v2529 = vunpack.c.h.b16 %v2354
          %v2530 = vunpack.c.l.b16 %v2355
          %v2531 = vunpack.c.h.b16 %v2355
          %v2532 = vunpack.c.l.b16 %v2356
          %v2533 = vunpack.c.h.b16 %v2356
          %v2534 = vunpack.c.l.b16 %v2357
          %v2535 = vunpack.c.h.b16 %v2357
          %v2536 = vunpack.c.l.b16 %v2358
          %v2537 = vunpack.c.h.b16 %v2358
          %v2538 = vunpack.c.l.b16 %v2359
          %v2539 = vunpack.c.h.b16 %v2359
          %v2540 = vunpack.c.l.b16 %v2360
          %v2541 = vunpack.c.h.b16 %v2360
          %v2542 = vunpack.c.l.b16 %v2361
          %v2543 = vunpack.c.h.b16 %v2361
          %v2544 = vunpack.c.l.b16 %v2362
          %v2545 = vunpack.c.h.b16 %v2362
          %v2546 = vunpack.c.l.b16 %v2363
          %v2547 = vunpack.c.h.b16 %v2363
          %v2548 = vunpack.c.l.b16 %v2364
          %v2549 = vunpack.c.h.b16 %v2364
          %v2550 = vunpack.c.l.b16 %v2365
          %v2551 = vunpack.c.h.b16 %v2365
          %v2552 = vunpack.c.l.b16 %v2366
          %v2553 = vunpack.c.h.b16 %v2366
          %v2554 = vunpack.c.l.b16 %v2367
          %v2555 = vunpack.c.h.b16 %v2367
          %v2556 = vunpack.c.l.b16 %v2368
          %v2557 = vunpack.c.h.b16 %v2368
          %v2558 = vunpack.c.l.b16 %v2369
          %v2559 = vunpack.c.h.b16 %v2369
          %v2560 = vunpack.c.l.b16 %v2370
          %v2561 = vunpack.c.h.b16 %v2370
          %v2562 = vunpack.c.l.b16 %v2371
          %v2563 = vunpack.c.h.b16 %v2371
          %v2564 = vunpack.c.l.b16 %v2372
          %v2565 = vunpack.c.h.b16 %v2372
          %v2566 = vpack.c.b16 %v2440, %v2438
          %v2567 = vpack.c.b16 %v2441, %v2439
          %v2568 = vpack.c.b16 %v2444, %v2442
          %v2569 = vpack.c.b16 %v2445, %v2443
          %v2570 = vpack.c.b16 %v2448, %v2446
          %v2571 = vpack.c.b16 %v2449, %v2447
          %v2572 = vpack.c.b16 %v2452, %v2450
          %v2573 = vpack.c.b16 %v2453, %v2451
          %v2574 = vpack.c.b16 %v2456, %v2454
          %v2575 = vpack.c.b16 %v2457, %v2455
          %v2576 = vpack.c.b16 %v2460, %v2458
          %v2577 = vpack.c.b16 %v2461, %v2459
          %v2578 = vpack.c.b16 %v2464, %v2462
          %v2579 = vpack.c.b16 %v2465, %v2463
          %v2580 = vpack.c.b16 %v2468, %v2466
          %v2581 = vpack.c.b16 %v2469, %v2467
          %v2582 = vpack.c.b16 %v2472, %v2470
          %v2583 = vpack.c.b16 %v2473, %v2471
          %v2584 = vpack.c.b16 %v2476, %v2474
          %v2585 = vpack.c.b16 %v2477, %v2475
          %v2586 = vpack.c.b16 %v2480, %v2478
          %v2587 = vpack.c.b16 %v2481, %v2479
          %v2588 = vpack.c.b16 %v2484, %v2482
          %v2589 = vpack.c.b16 %v2485, %v2483
          %v2590 = vpack.c.b16 %v2488, %v2486
          %v2591 = vpack.c.b16 %v2489, %v2487
          %v2592 = vpack.c.b16 %v2492, %v2490
          %v2593 = vpack.c.b16 %v2493, %v2491
          %v2594 = vpack.c.b16 %v2496, %v2494
          %v2595 = vpack.c.b16 %v2497, %v2495
          %v2596 = vpack.c.b16 %v2500, %v2498
          %v2597 = vpack.c.b16 %v2501, %v2499
          %v2598 = vpack.c.b16 %v2504, %v2502
          %v2599 = vpack.c.b16 %v2505, %v2503
          %v2600 = vpack.c.b16 %v2508, %v2506
          %v2601 = vpack.c.b16 %v2509, %v2507
          %v2602 = vpack.c.b16 %v2512, %v2510
          %v2603 = vpack.c.b16 %v2513, %v2511
          %v2604 = vpack.c.b16 %v2516, %v2514
          %v2605 = vpack.c.b16 %v2517, %v2515
          %v2606 = vpack.c.b16 %v2520, %v2518
          %v2607 = vpack.c.b16 %v2521, %v2519
          %v2608 = vpack.c.b16 %v2524, %v2522
          %v2609 = vpack.c.b16 %v2525, %v2523
          %v2610 = vpack.c.b16 %v2528, %v2526
          %v2611 = vpack.c.b16 %v2529, %v2527
          %v2612 = vpack.c.b16 %v2532, %v2530
          %v2613 = vpack.c.b16 %v2533, %v2531
          %v2614 = vpack.c.b16 %v2536, %v2534
          %v2615 = vpack.c.b16 %v2537, %v2535
          %v2616 = vpack.c.b16 %v2540, %v2538
          %v2617 = vpack.c.b16 %v2541, %v2539
          %v2618 = vpack.c.b16 %v2544, %v2542
          %v2619 = vpack.c.b16 %v2545, %v2543
          %v2620 = vpack.c.b16 %v2548, %v2546
          %v2621 = vpack.c.b16 %v2549, %v2547
          %v2622 = vpack.c.b16 %v2552, %v2550
          %v2623 = vpack.c.b16 %v2553, %v2551
          %v2624 = vpack.c.b16 %v2556, %v2554
          %v2625 = vpack.c.b16 %v2557, %v2555
          %v2626 = vpack.c.b16 %v2560, %v2558
          %v2627 = vpack.c.b16 %v2561, %v2559
          %v2628 = vpack.c.b16 %v2564, %v2562
          %v2629 = vpack.c.b16 %v2565, %v2563
          %v2695 = vlaneseq
          %v2696 = vshrl.u32 %v2695, 7
          %v2697 = vsub.s32 0, %v2696
          %v2698 = vrot.slane %v2373, %v2697
          %v2699 = vlaneseq
          %v2700 = vshrl.u32 %v2699, 7
          %v2701 = vsub.s32 1, %v2700
          %v2702 = vrot.slane %v2373, %v2701
          %2705 = vmatprep.subr.bf16.mxu0 %v2581
          %2706 = vmatpush1.bf16.msra.mxu0 %v2580
          %2707 = vmatprep.subr.bf16.mxu0 %v2579
          %2708 = vmatpush1.bf16.msra.mxu0 %v2578
          %2709 = vmatprep.subr.bf16.mxu0 %v2577
          %2710 = vmatpush1.bf16.msra.mxu0 %v2576
          %2711 = vmatprep.subr.bf16.mxu0 %v2575
          %2712 = vmatpush1.bf16.msra.mxu0 %v2574
          %2713 = vmatprep.subr.bf16.mxu0 %v2573
          %2714 = vmatpush1.bf16.msra.mxu0 %v2572
          %2715 = vmatprep.subr.bf16.mxu0 %v2571
          %2716 = vmatpush1.bf16.msra.mxu0 %v2570
          %2717 = vmatprep.subr.bf16.mxu0 %v2569
          %2718 = vmatpush1.bf16.msra.mxu0 %v2568
          %2719 = vmatprep.subr.bf16.mxu0 %v2567
          %2720 = vmatpush1.bf16.msra.mxu0 %v2566
          %2721 = vmatprep.subr.bf16.mxu0 %v2597
          %2722 = vmatpush2.bf16.msra.mxu0 %v2596
          %2723 = vmatprep.subr.bf16.mxu0 %v2595
          %2724 = vmatpush2.bf16.msra.mxu0 %v2594
          %2725 = vmatprep.subr.bf16.mxu0 %v2593
          %2726 = vmatpush2.bf16.msra.mxu0 %v2592
          %2727 = vmatprep.subr.bf16.mxu0 %v2591
          %2728 = vmatpush2.bf16.msra.mxu0 %v2590
          %2729 = vmatprep.subr.bf16.mxu0 %v2589
          %2730 = vmatpush2.bf16.msra.mxu0 %v2588
          %2731 = vmatprep.subr.bf16.mxu0 %v2587
          %2732 = vmatpush2.bf16.msra.mxu0 %v2586
          %2733 = vmatprep.subr.bf16.mxu0 %v2585
          %2734 = vmatpush2.bf16.msra.mxu0 %v2584
          %2735 = vmatprep.subr.bf16.mxu0 %v2583
          %2736 = vmatpush2.bf16.msra.mxu0 %v2582
          %2737 = vmatprep.mubr.bf16.mxu0 %v2306
          %2738 = vmatmul.mubr.bf16.gmra.mxu0 %v2305
          %v2739 = vpop.f32.mrf.mxu0
          %v2740 = vadd.f32 %v2698, %v2739
          %v2741 = vpop.f32.mrf.mxu0
          %v2742 = vadd.f32 %v2702, %v2741
          %v2743 = vpop.f32.mrf.mxu0
          %v2744 = vpop.f32.mrf.mxu0
          %2745 = vdwg.mxu0
          %2746 = vmatprep.subr.bf16.mxu0 %v2613
          %2747 = vmatpush1.bf16.msra.mxu0 %v2612
          %2748 = vmatprep.subr.bf16.mxu0 %v2611
          %2749 = vmatpush1.bf16.msra.mxu0 %v2610
          %2750 = vmatprep.subr.bf16.mxu0 %v2609
          %2751 = vmatpush1.bf16.msra.mxu0 %v2608
          %2752 = vmatprep.subr.bf16.mxu0 %v2607
          %2753 = vmatpush1.bf16.msra.mxu0 %v2606
          %2754 = vmatprep.subr.bf16.mxu0 %v2605
          %2755 = vmatpush1.bf16.msra.mxu0 %v2604
          %2756 = vmatprep.subr.bf16.mxu0 %v2603
          %2757 = vmatpush1.bf16.msra.mxu0 %v2602
          %2758 = vmatprep.subr.bf16.mxu0 %v2601
          %2759 = vmatpush1.bf16.msra.mxu0 %v2600
          %2760 = vmatprep.subr.bf16.mxu0 %v2599
          %2761 = vmatpush1.bf16.msra.mxu0 %v2598
          %2762 = vmatprep.subr.bf16.mxu0 %v2629
          %2763 = vmatpush2.bf16.msra.mxu0 %v2628
          %2764 = vmatprep.subr.bf16.mxu0 %v2627
          %2765 = vmatpush2.bf16.msra.mxu0 %v2626
          %2766 = vmatprep.subr.bf16.mxu0 %v2625
          %2767 = vmatpush2.bf16.msra.mxu0 %v2624
          %2768 = vmatprep.subr.bf16.mxu0 %v2623
          %2769 = vmatpush2.bf16.msra.mxu0 %v2622
          %2770 = vmatprep.subr.bf16.mxu0 %v2621
          %2771 = vmatpush2.bf16.msra.mxu0 %v2620
          %2772 = vmatprep.subr.bf16.mxu0 %v2619
          %2773 = vmatpush2.bf16.msra.mxu0 %v2618
          %2774 = vmatprep.subr.bf16.mxu0 %v2617
          %2775 = vmatpush2.bf16.msra.mxu0 %v2616
          %2776 = vmatprep.subr.bf16.mxu0 %v2615
          %2777 = vmatpush2.bf16.msra.mxu0 %v2614
          %2778 = vmatprep.mubr.bf16.mxu0 %v2308
          %2779 = vmatmul.mubr.bf16.gmra.mxu0 %v2307
          %v2780 = vpop.f32.mrf.mxu0
          %v2781 = vadd.f32 %v2740, %v2780
          %v2782 = vpop.f32.mrf.mxu0
          %v2783 = vadd.f32 %v2742, %v2782
          %v2784 = vpop.f32.mrf.mxu0
          %v2785 = vpop.f32.mrf.mxu0
          %2786 = vdwg.mxu0
          %vm2787 = vcmask 1040384
          %v2788 = vsel %vm2787, %v2781, 0.0
          %v2789 = vsel %vm2787, %v2783, 0.0
          %v2790 = vadd.f32 %v2788, %v2789
          %2791 = vadd.xlane.f32.xlu0 %v2790
          %v2792 = vpop.xlane.xlu0 %2791
          %v2793 = vrcp.pop 256.0
          %v2794 = vmul.f32 %v2792, %v2793
          %v2795 = vsub.f32 %v2781, %v2794
          %v2796 = vsub.f32 %v2783, %v2794
          %v2797 = vmul.f32 %v2795, %v2795
          %v2798 = vmul.f32 %v2796, %v2796
          %v2799 = vsel %vm2787, %v2797, 0.0
          %v2800 = vsel %vm2787, %v2798, 0.0
          %v2801 = vadd.f32 %v2799, %v2800
          %2802 = vadd.xlane.f32.xlu0 %v2801
          %v2803 = vpop.xlane.xlu0 %2802
          %v2804 = vmul.f32 %v2803, %v2793
          %v2805 = vadd.f32 %v2804, 1e-05
          %v2806 = vrsqrt.pop %v2805
          %v2807 = vmul.f32 %v2795, %v2806
          %v2808 = vmul.f32 %v2796, %v2806
          %v2809 = vld [vmem:[%s7] sm:$0x3]
          %v2811 = vlaneseq
          %v2812 = vshrl.u32 %v2811, 7
          %v2813 = vsub.s32 0, %v2812
          %v2814 = vrot.slane %v2809, %v2813
          %v2815 = vlaneseq
          %v2816 = vshrl.u32 %v2815, 7
          %v2817 = vsub.s32 1, %v2816
          %v2818 = vrot.slane %v2809, %v2817
          %v2821 = vmul.f32 %v2807, %v2814
          %v2822 = vmul.f32 %v2808, %v2818
          %v2823 = vld [vmem:[%s8] sm:$0x3]
          %v2825 = vlaneseq
          %v2826 = vshrl.u32 %v2825, 7
          %v2827 = vsub.s32 0, %v2826
          %v2828 = vrot.slane %v2823, %v2827
          %v2829 = vlaneseq
          %v2830 = vshrl.u32 %v2829, 7
          %v2831 = vsub.s32 1, %v2830
          %v2832 = vrot.slane %v2823, %v2831
          %v2835 = vadd.f32 %v2821, %v2828
          %v2836 = vadd.f32 %v2822, %v2832
          %v2837 = vmax.f32 %v2835, 0.0
          %v2838 = vmax.f32 %v2836, 0.0
          %v2839 = vpack.c.bf16 %v2837, %v2837
          %v2840 = vpack.c.bf16 %v2838, %v2838
          %v2841 = vld [vmem:[#allocation12] sm:$0xf]
          %v2842 = vld [vmem:[#allocation12 + $0x4] sm:$0xf]
          %v2843 = vld [vmem:[#allocation12 + $0x8] sm:$0xf]
          %v2844 = vld [vmem:[#allocation12 + $0xc] sm:$0xf]
          %v2845 = vld [vmem:[#allocation12 + $0x10] sm:$0xf]
          %v2846 = vld [vmem:[#allocation12 + $0x14] sm:$0xf]
          %v2847 = vld [vmem:[#allocation12 + $0x18] sm:$0xf]
          %v2848 = vld [vmem:[#allocation12 + $0x1c] sm:$0xf]
          %v2849 = vld [vmem:[#allocation12 + $0x20] sm:$0xf]
          %v2850 = vld [vmem:[#allocation12 + $0x24] sm:$0xf]
          %v2851 = vld [vmem:[#allocation12 + $0x28] sm:$0xf]
          %v2852 = vld [vmem:[#allocation12 + $0x2c] sm:$0xf]
          %v2853 = vld [vmem:[#allocation12 + $0x30] sm:$0xf]
          %v2854 = vld [vmem:[#allocation12 + $0x34] sm:$0xf]
          %v2855 = vld [vmem:[#allocation12 + $0x38] sm:$0xf]
          %v2856 = vld [vmem:[#allocation12 + $0x3c] sm:$0xf]
          %v2857 = vld [vmem:[#allocation12 + $0x40] sm:$0xf]
          %v2858 = vld [vmem:[#allocation12 + $0x44] sm:$0xf]
          %v2859 = vld [vmem:[#allocation12 + $0x48] sm:$0xf]
          %v2860 = vld [vmem:[#allocation12 + $0x4c] sm:$0xf]
          %v2861 = vld [vmem:[#allocation12 + $0x50] sm:$0xf]
          %v2862 = vld [vmem:[#allocation12 + $0x54] sm:$0xf]
          %v2863 = vld [vmem:[#allocation12 + $0x58] sm:$0xf]
          %v2864 = vld [vmem:[#allocation12 + $0x5c] sm:$0xf]
          %v2865 = vld [vmem:[#allocation12 + $0x60] sm:$0xf]
          %v2866 = vld [vmem:[#allocation12 + $0x64] sm:$0xf]
          %v2867 = vld [vmem:[#allocation12 + $0x68] sm:$0xf]
          %v2868 = vld [vmem:[#allocation12 + $0x6c] sm:$0xf]
          %v2869 = vld [vmem:[#allocation12 + $0x70] sm:$0xf]
          %v2870 = vld [vmem:[#allocation12 + $0x74] sm:$0xf]
          %v2871 = vld [vmem:[#allocation12 + $0x78] sm:$0xf]
          %v2872 = vld [vmem:[#allocation12 + $0x7c] sm:$0xf]
          %v2873 = vld [vmem:[%s10] sm:$0x1]
          %v2906 = vunpack.c.l.b16 %v2841
          %v2907 = vunpack.c.l.b16 %v2842
          %v2908 = vunpack.c.l.b16 %v2843
          %v2909 = vunpack.c.l.b16 %v2844
          %v2910 = vunpack.c.l.b16 %v2845
          %v2911 = vunpack.c.l.b16 %v2846
          %v2912 = vunpack.c.l.b16 %v2847
          %v2913 = vunpack.c.l.b16 %v2848
          %v2914 = vunpack.c.l.b16 %v2849
          %v2915 = vunpack.c.l.b16 %v2850
          %v2916 = vunpack.c.l.b16 %v2851
          %v2917 = vunpack.c.l.b16 %v2852
          %v2918 = vunpack.c.l.b16 %v2853
          %v2919 = vunpack.c.l.b16 %v2854
          %v2920 = vunpack.c.l.b16 %v2855
          %v2921 = vunpack.c.l.b16 %v2856
          %v2922 = vunpack.c.l.b16 %v2857
          %v2923 = vunpack.c.l.b16 %v2858
          %v2924 = vunpack.c.l.b16 %v2859
          %v2925 = vunpack.c.l.b16 %v2860
          %v2926 = vunpack.c.l.b16 %v2861
          %v2927 = vunpack.c.l.b16 %v2862
          %v2928 = vunpack.c.l.b16 %v2863
          %v2929 = vunpack.c.l.b16 %v2864
          %v2930 = vunpack.c.l.b16 %v2865
          %v2931 = vunpack.c.l.b16 %v2866
          %v2932 = vunpack.c.l.b16 %v2867
          %v2933 = vunpack.c.l.b16 %v2868
          %v2934 = vunpack.c.l.b16 %v2869
          %v2935 = vunpack.c.l.b16 %v2870
          %v2936 = vunpack.c.l.b16 %v2871
          %v2937 = vunpack.c.l.b16 %v2872
          %v2938 = vpack.c.b16 %v2907, %v2906
          %v2939 = vpack.c.b16 %v2909, %v2908
          %v2940 = vpack.c.b16 %v2911, %v2910
          %v2941 = vpack.c.b16 %v2913, %v2912
          %v2942 = vpack.c.b16 %v2915, %v2914
          %v2943 = vpack.c.b16 %v2917, %v2916
          %v2944 = vpack.c.b16 %v2919, %v2918
          %v2945 = vpack.c.b16 %v2921, %v2920
          %v2946 = vpack.c.b16 %v2923, %v2922
          %v2947 = vpack.c.b16 %v2925, %v2924
          %v2948 = vpack.c.b16 %v2927, %v2926
          %v2949 = vpack.c.b16 %v2929, %v2928
          %v2950 = vpack.c.b16 %v2931, %v2930
          %v2951 = vpack.c.b16 %v2933, %v2932
          %v2952 = vpack.c.b16 %v2935, %v2934
          %v2953 = vpack.c.b16 %v2937, %v2936
          %2970 = vmatprep.subr.bf16.mxu0 0
          %2971 = vmatpush1.bf16.msra.mxu0 %v2945
          %2972 = vmatprep.subr.bf16.mxu0 0
          %2973 = vmatpush1.bf16.msra.mxu0 %v2944
          %2974 = vmatprep.subr.bf16.mxu0 0
          %2975 = vmatpush1.bf16.msra.mxu0 %v2943
          %2976 = vmatprep.subr.bf16.mxu0 0
          %2977 = vmatpush1.bf16.msra.mxu0 %v2942
          %2978 = vmatprep.subr.bf16.mxu0 0
          %2979 = vmatpush1.bf16.msra.mxu0 %v2941
          %2980 = vmatprep.subr.bf16.mxu0 0
          %2981 = vmatpush1.bf16.msra.mxu0 %v2940
          %2982 = vmatprep.subr.bf16.mxu0 0
          %2983 = vmatpush1.bf16.msra.mxu0 %v2939
          %2984 = vmatprep.subr.bf16.mxu0 0
          %2985 = vmatpush1.bf16.msra.mxu0 %v2938
          %2986 = vmatprep.subr.bf16.mxu0 0
          %2987 = vmatpush2.bf16.msra.mxu0 %v2953
          %2988 = vmatprep.subr.bf16.mxu0 0
          %2989 = vmatpush2.bf16.msra.mxu0 %v2952
          %2990 = vmatprep.subr.bf16.mxu0 0
          %2991 = vmatpush2.bf16.msra.mxu0 %v2951
          %2992 = vmatprep.subr.bf16.mxu0 0
          %2993 = vmatpush2.bf16.msra.mxu0 %v2950
          %2994 = vmatprep.subr.bf16.mxu0 0
          %2995 = vmatpush2.bf16.msra.mxu0 %v2949
          %2996 = vmatprep.subr.bf16.mxu0 0
          %2997 = vmatpush2.bf16.msra.mxu0 %v2948
          %2998 = vmatprep.subr.bf16.mxu0 0
          %2999 = vmatpush2.bf16.msra.mxu0 %v2947
          %3000 = vmatprep.subr.bf16.mxu0 0
          %3001 = vmatpush2.bf16.msra.mxu0 %v2946
          %3002 = vmatprep.mubr.bf16.mxu0 %v2840
          %3003 = vmatmul.mubr.bf16.gmra.mxu0 %v2839
          %v3004 = vpop.f32.mrf.mxu0
          %v3005 = vadd.f32 %v2873, %v3004
          %v3006 = vpop.f32.mrf.mxu0
          %v3007 = vpop.f32.mrf.mxu0
          %v3008 = vpop.f32.mrf.mxu0
          %3009 = vdwg.mxu0
          %3010 = vst [vmem:[%s489] sm:$0x1] %v3005
        $region96: #{tpu_custom_call.1} parent=63 // pred_fallthru
          _
        %s3011 = sand.u32 %s289, 1
        %s3012 = scalar_lea.sflag [#allocation5], %s3011
        %s3013 = sand.u32 %s289, 1
        %s3014 = scalar_lea.vmem [#allocation14], %s3013
        // Predicated region
        $region97: #{tpu_custom_call.1} parent=63 // pred_check
          %p3015 = pneg %p299
        $region98: #{tpu_custom_call.1} parent=63 // pred_check_branch
          %3017 = sbr.rel (%p3015) target = $region100
        $region99: #{tpu_custom_call.1} parent=63 // pred_region
          %s3019 = ssub.s32 16, 16
          %3020 = vsyncadd %s3012, %s3019
          %s3021 = smul.addr %s35, 16
          %s3022 = scalar_lea.hbm %s11, %s3021
          %s3024 = sshll.u32 %s3014, 4
          %s3025 = int_to_ptr.vmem [resolvable:$true] %s3024
          %3027 = dma.vmem_to_hbm [thread:$0]  %s3025, 16, %s3022, %s3012
        $region100: #{tpu_custom_call.1} parent=63 // pred_fallthru
          _
      $region64: #{tpu_custom_call.1} parent=5 // pred_fallthru
        _
      %p3028 = scmp.le.s32.totalorder 2, %s26
      // Predicated region
      $region101: #{tpu_custom_call.1} parent=5 // pred_check
        %p3029 = pneg %p3028
      $region102: #{tpu_custom_call.1} parent=5 // pred_check_branch
        %3031 = sbr.rel (%p3029) target = $region104
      $region103: #{tpu_custom_call.1} parent=5 // pred_region
        %s3032 = ssub.s32 %s26, 2
        // Predicated region
        $region105: #{tpu_custom_call.1} parent=103 // pred_check
          %p3033 = pneg %p305
        $region106: #{tpu_custom_call.1} parent=103 // pred_check_branch
          %3035 = sbr.rel (%p3033) target = $region108
        $region107: #{tpu_custom_call.1} parent=103 // pred_region
          %s3036 = sand.u32 %s290, 1
          %s3037 = scalar_lea.sflag [#allocation5], %s3036
          %s3038 = sand.u32 %s290, 1
          %s3039 = scalar_lea.vmem [#allocation14], %s3038
          %3040 = dma.done %s3037, 16
        $region108: #{tpu_custom_call.1} parent=103 // pred_fallthru
          _
      $region104: #{tpu_custom_call.1} parent=5 // pred_fallthru
        _
    $region6: #{tpu_custom_call.1} parent=1 // loop_footer
      %s30 = sadd.s32 1, %s26
    $region7: #{tpu_custom_call.1} parent=1 // loop_footer_branch
      %25 = sbr.rel target = $region3
    $region8: #{tpu_custom_call.1} parent=1 // loop_exit
      _
    %3041 = vsyncpa [#allocation4], 1
    %s3042 = scalar_lea.sflag [#allocation4], 1
    %3043 = vsyncpa %s3042, 1
    %3044 = vsyncpa [#allocation7], 1
    %3045 = vsyncpa [#allocation10], 1
    %3046 = vsyncpa [#allocation13], 1
    %3047 = vsyncpa [#allocation5], 1
    %s3048 = scalar_lea.sflag [#allocation5], 1
    %3049 = vsyncpa %s3048, 1

</llo_original>
